<compile_context>
chip_gen: v6e
topology: v6e:2x2x1
jax: 0.10.0
libtpu: 0.0.40
codegen_flags: <defaults>
</compile_context>

<pallas_src>
import math

import jax
import jax.numpy as jnp
import numpy as np
from jax import lax
from jax.experimental import pallas as pl
from jax.experimental.pallas import tpu as pltpu


def _se_bottleneck_kernel(x_ref, w1_ref, w2_ref, w3_ref, fc1w_ref, fc2w_ref,
                          bias_ref, out_ref, pad_ref):
    NB, H, W, Cin = x_ref.shape
    cfg = w1_ref.shape[1]
    cexp = w3_ref.shape[1]            # cfg * expansion
    hid = fc1w_ref.shape[1]
    M = NB * H * W
    mxu_dtype = w1_ref.dtype          # bf16 fast path (all generations) or f32

    # Packed per-channel vectors (BN scales already folded into the conv weights).
    b1 = bias_ref[0:1, :cfg]          # bn1 bias
    b2 = bias_ref[1:2, :cfg]          # bn2 bias
    b3 = bias_ref[2:3, :cexp]         # bn3 bias
    fc1b = bias_ref[3:4, :hid]
    fc2b = bias_ref[4:5, :cexp]

    # ---- conv1: 1x1 -> one (M, Cin) x (Cin, cfg) matmul; bias + ReLU in f32 ----
    x = x_ref[...].reshape(M, Cin).astype(mxu_dtype)
    h = jnp.dot(x, w1_ref[...], preferred_element_type=jnp.float32)
    h = jnp.maximum(h + b1, 0.0)

    # ---- conv2: 3x3 pad=1 stride=1 as nine accumulating K=cfg dots ----
    # Stage h (already in mxu_dtype) with a 1-pixel zero halo in VMEM scratch and read
    # the nine shifted windows directly from it: no (M, 9*cfg) im2col buffer, no lane
    # concat, no extra cast copies.  Only the halo border is zeroed (the interior is
    # fully overwritten each step); the batch grid axis is "parallel" so a zero-once
    # init is not safe, but the border fill is tiny.
    zrow = jnp.zeros((NB, 1, W + 2, cfg), mxu_dtype)
    zcol = jnp.zeros((NB, H, 1, cfg), mxu_dtype)
    pad_ref[:, 0:1, :, :] = zrow
    pad_ref[:, H + 1:H + 2, :, :] = zrow
    pad_ref[:, 1:H + 1, 0:1, :] = zcol
    pad_ref[:, 1:H + 1, W + 1:W + 2, :] = zcol
    pad_ref[:, 1:H + 1, 1:W + 1, :] = h.reshape(NB, H, W, cfg).astype(mxu_dtype)

    acc = jnp.zeros((M, cfg), jnp.float32)
    for dy in range(3):
        for dx in range(3):
            win = pad_ref[:, dy:dy + H, dx:dx + W, :].reshape(M, cfg)
            acc = acc + jnp.dot(win, w2_ref[dy * 3 + dx],
                                preferred_element_type=jnp.float32)
    h = jnp.maximum(acc + b2, 0.0)

    # ---- conv3: 1x1 -> (M, cfg) x (cfg, cfg*4); bias only (no ReLU before SE) ----
    h = jnp.dot(h.astype(mxu_dtype), w3_ref[...], preferred_element_type=jnp.float32)
    h = h + b3

    # ---- SE: per-image GAP -> fc1 -> ReLU -> fc2 -> sigmoid -> channel scale ----
    h3 = h.reshape(NB, H * W, cexp)
    y = jnp.mean(h3, axis=1)                              # (NB, cexp)
    z = jnp.maximum(
        jnp.dot(y, fc1w_ref[...], preferred_element_type=jnp.float32) + fc1b, 0.0)
    s = jax.nn.sigmoid(
        jnp.dot(z, fc2w_ref[...], preferred_element_type=jnp.float32) + fc2b)
    h3 = h3 * s[:, None, :]

    # ---- residual add (stride=1, inplanes == cfg*4, downsample=None) + ReLU ----
    # Re-read x here instead of keeping the conv1 operand live across the whole body.
    res = x_ref[...].reshape(NB, H * W, Cin).astype(jnp.float32)
    out = jnp.maximum(h3 + res, 0.0)
    out_ref[...] = out.reshape(NB, H, W, cexp).astype(out_ref.dtype)


def cifar_se_bottleneck(x_nhwc, p, *, batch_block=None,
                        mxu_dtype=jnp.bfloat16, io_dtype=jnp.bfloat16):
    """x_nhwc: (N, H, W, Cin) with Cin == cfg*4.  Returns (N, H, W, cfg*4) in io_dtype."""
    N, H, W, Cin = x_nhwc.shape
    cfg = p["w1"].shape[1]
    cexp = p["w3"].shape[1]
    hid = p["fc1w"].shape[1]
    assert Cin == cexp, ("residual add requires inplanes == cfg*expansion "
                         "(stride=1, downsample=None)")
    assert hid <= cexp and cfg <= cexp

    # ---- fold BN scales into the conv weights ((x@w)*s == x@(w*s)); biases stay ----
    w1 = (p["w1"] * p["bn1_scale"][None, :]).astype(mxu_dtype)               # (Cin, cfg)
    w2 = (p["w2"] * p["bn2_scale"][None, None, None, :]
          ).reshape(9, cfg, cfg).astype(mxu_dtype)                           # (9, cfg, cfg)
    w3 = (p["w3"] * p["bn3_scale"][None, :]).astype(mxu_dtype)               # (cfg, cexp)
    fc1w = p["fc1w"].astype(jnp.float32)                                     # tiny; keep f32
    fc2w = p["fc2w"].astype(jnp.float32)

    # ---- pack the small per-channel vectors into a single (5, cexp) input ----
    bias_pack = jnp.zeros((5, cexp), jnp.float32)
    bias_pack = bias_pack.at[0, :cfg].set(p["bn1_bias"])
    bias_pack = bias_pack.at[1, :cfg].set(p["bn2_bias"])
    bias_pack = bias_pack.at[2, :cexp].set(p["bn3_bias"])
    bias_pack = bias_pack.at[3, :hid].set(p["fc1b"])
    bias_pack = bias_pack.at[4, :cexp].set(p["fc2b"])

    # ---- generation-aware VMEM budget ----
    try:
        vmem_cap = int(pltpu.get_tpu_info().vmem_capacity_bytes)
    except Exception:
        vmem_cap = 64 << 20            # conservative: v7x per-TC VMEM
    vmem_limit = min(int(vmem_cap * 0.75), 96 << 20)

    if batch_block is None:
        bpe_io = jnp.dtype(io_dtype).itemsize
        bpe_mxu = jnp.dtype(mxu_dtype).itemsize
        per_img = (2 * H * W * Cin * bpe_io                 # x block (double-buffered)
                   + 2 * H * W * cexp * bpe_io              # out block (double-buffered)
                   + (H + 2) * (W + 2) * cfg * bpe_mxu      # halo scratch
                   + H * W * (3 * cfg + 2 * cexp) * 4)      # f32 intermediates / copies
        cap = max(1, (vmem_limit // 2) // max(per_img, 1))
        min_grid = min(4, N)           # >= 2 steps per TensorCore on v7x when N allows
        max_nb = max(1, min(cap, N // min_grid))
        divs = [d for d in range(1, N + 1) if N % d == 0 and d <= max_nb]
        aligned = [d for d in divs if (d * H * W) % 256 == 0]   # MXU-row aligned M
        batch_block = max(aligned) if aligned else max(divs)
    NB = batch_block
    assert N % NB == 0

    args = (x_nhwc.astype(io_dtype), w1, w2, w3, fc1w, fc2w, bias_pack)

    def full_spec(a):
        nd = a.ndim
        return pl.BlockSpec(a.shape, lambda b, _nd=nd: (0,) * _nd)

    in_specs = [pl.BlockSpec((NB, H, W, Cin), lambda b: (b, 0, 0, 0))] + \
               [full_spec(a) for a in args[1:]]
    out_specs = pl.BlockSpec((NB, H, W, cexp), lambda b: (b, 0, 0, 0))

    return pl.pallas_call(
        _se_bottleneck_kernel,
        out_shape=jax.ShapeDtypeStruct((N, H, W, cexp), io_dtype),
        grid_spec=pltpu.PrefetchScalarGridSpec(
            num_scalar_prefetch=0,
            grid=(N // NB,),
            in_specs=in_specs,
            out_specs=out_specs,
            scratch_shapes=[pltpu.VMEM((NB, H + 2, W + 2, cfg), mxu_dtype)],
        ),
        compiler_params=pltpu.CompilerParams(
            dimension_semantics=("parallel",),     # batch blocks are independent
            vmem_limit_bytes=vmem_limit),
    )(*args)


def init_params(key, inplanes, cfg, reduction=16):
    cexp = cfg * 4
    hid = cexp // reduction
    assert hid >= 1, "cfg*4 must be >= reduction"
    ks = jax.random.split(key, 19)

    def u(k, shape, scale):
        return jax.random.uniform(k, shape, jnp.float32, -scale, scale)

    eps = 1e-5
    w1 = u(ks[0], (inplanes, cfg), 1.0 / math.sqrt(inplanes))
    w2 = u(ks[1], (3, 3, cfg, cfg), 1.0 / math.sqrt(cfg * 9))
    w3 = u(ks[2], (cfg, cexp), 1.0 / math.sqrt(cfg))
    fc1w = u(ks[3], (cexp, hid), 1.0 / math.sqrt(cexp))
    fc1b = u(ks[4], (hid,), 1.0 / math.sqrt(cexp))
    fc2w = u(ks[5], (hid, cexp), 1.0 / math.sqrt(hid))
    fc2b = u(ks[6], (cexp,), 1.0 / math.sqrt(hid))

    def bn(kg, kb, km, kv, c):
        g = jax.random.uniform(kg, (c,), jnp.float32, 0.5, 1.5)
        b = u(kb, (c,), 0.1)
        m = u(km, (c,), 0.1)
        v = jax.random.uniform(kv, (c,), jnp.float32, 0.5, 1.5)
        s = g / jnp.sqrt(v + eps)
        return s, b - m * s

    bn1_scale, bn1_bias = bn(ks[7], ks[8], ks[9], ks[10], cfg)
    bn2_scale, bn2_bias = bn(ks[11], ks[12], ks[13], ks[14], cfg)
    bn3_scale, bn3_bias = bn(ks[15], ks[16], ks[17], ks[18], cexp)

    return dict(w1=w1, w2=w2, w3=w3,
                fc1w=fc1w, fc1b=fc1b, fc2w=fc2w, fc2b=fc2b,
                bn1_scale=bn1_scale, bn1_bias=bn1_bias,
                bn2_scale=bn2_scale, bn2_bias=bn2_bias,
                bn3_scale=bn3_scale, bn3_bias=bn3_bias)


def reference(x_nhwc, p):
    dn = ("NHWC", "HWIO", "NHWC")
    h = jnp.einsum("nhwc,cd->nhwd", x_nhwc, p["w1"])
    h = jnp.maximum(h * p["bn1_scale"] + p["bn1_bias"], 0.0)
    h = lax.conv_general_dilated(h, p["w2"], (1, 1), "SAME", dimension_numbers=dn)
    h = jnp.maximum(h * p["bn2_scale"] + p["bn2_bias"], 0.0)
    h = jnp.einsum("nhwc,cd->nhwd", h, p["w3"])
    h = h * p["bn3_scale"] + p["bn3_bias"]
    y = jnp.mean(h, axis=(1, 2))
    z = jnp.maximum(y @ p["fc1w"] + p["fc1b"], 0.0)
    s = jax.nn.sigmoid(z @ p["fc2w"] + p["fc2b"])
    h = h * s[:, None, None, :]
    return jnp.maximum(h + x_nhwc, 0.0)


if __name__ == "__main__":
    # Module config: stride=1, downsample=None => inplanes must equal cfg*expansion.
    # cfg=32 => in/out channels = 128 (exactly lane-dense on the 128-wide lane axis).
    N, H, W = 2, 8, 8
    cfg, reduction = 32, 16
    inplanes = cfg * 4

    key = jax.random.PRNGKey(0)
    kx, kp = jax.random.split(key)
    x_nchw = jax.random.normal(kx, (N, inplanes, H, W), jnp.float32)  # PyTorch layout
    x_nhwc = jnp.transpose(x_nchw, (0, 2, 3, 1))                      # kernel layout
    params = init_params(kp, inplanes, cfg, reduction)

    ref = reference(x_nhwc, params)

    # f32 everywhere: exact-ish match against the JAX reference.
    out_f32 = jax.block_until_ready(cifar_se_bottleneck(
        x_nhwc, params, mxu_dtype=jnp.float32, io_dtype=jnp.float32))
    assert out_f32.shape == (N, H, W, inplanes)
    np.testing.assert_allclose(np.asarray(out_f32), np.asarray(ref),
                               rtol=1e-4, atol=1e-4)

    # Default fast path: bf16 HBM I/O + bf16 MXU operands (all generations);
    # accumulation and all elementwise math stay f32.
    out_bf16 = jax.block_until_ready(cifar_se_bottleneck(x_nhwc, params))
    ref_bf16 = reference(x_nhwc.astype(jnp.bfloat16).astype(jnp.float32), params)
    np.testing.assert_allclose(
        np.asarray(jnp.asarray(out_bf16, dtype=jnp.float32)),
        np.asarray(ref_bf16), rtol=3e-2, atol=3e-2)

    print("KERNEL_OK")
</pallas_src>

<mosaic_0001>
module attributes {stable_mosaic.version = 11 : i64} {
  func.func @_se_bottleneck_kernel(%arg0: i32, %arg1: memref<1x8x8x128xf32, #tpu.memory_space<vmem>>, %arg2: memref<128x32xf32, #tpu.memory_space<vmem>>, %arg3: memref<9x32x32xf32, #tpu.memory_space<vmem>>, %arg4: memref<32x128xf32, #tpu.memory_space<vmem>>, %arg5: memref<128x8xf32, #tpu.memory_space<vmem>>, %arg6: memref<8x128xf32, #tpu.memory_space<vmem>>, %arg7: memref<5x128xf32, #tpu.memory_space<vmem>>, %arg8: memref<1x8x8x128xf32, #tpu.memory_space<vmem>>, %arg9: memref<1x10x10x32xf32, #tpu.memory_space<vmem>>) attributes {dimension_semantics = [#tpu.dimension_semantics<parallel>], iteration_bounds = array<i64: 2>, scalar_prefetch = 0 : i64, scratch_operands = 1 : i64, tpu.core_type = #tpu.core_type<tc>, window_params = [{transform_indices = @transform_0, window_bounds = array<i64: 1, 8, 8, 128>}, {pipeline_mode = #tpu.pipeline_mode<synchronous>, transform_indices = @transform_1, window_bounds = array<i64: 128, 32>}, {pipeline_mode = #tpu.pipeline_mode<synchronous>, transform_indices = @transform_2, window_bounds = array<i64: 9, 32, 32>}, {pipeline_mode = #tpu.pipeline_mode<synchronous>, transform_indices = @transform_3, window_bounds = array<i64: 32, 128>}, {pipeline_mode = #tpu.pipeline_mode<synchronous>, transform_indices = @transform_4, window_bounds = array<i64: 128, 8>}, {pipeline_mode = #tpu.pipeline_mode<synchronous>, transform_indices = @transform_5, window_bounds = array<i64: 8, 128>}, {pipeline_mode = #tpu.pipeline_mode<synchronous>, transform_indices = @transform_6, window_bounds = array<i64: 5, 128>}, {transform_indices = @transform_7, window_bounds = array<i64: 1, 8, 8, 128>}]} {
    %c0 = arith.constant 0 : index
    %c0_0 = arith.constant 0 : index
    %0 = vector.load %arg7[%c0, %c0_0] : memref<5x128xf32, #tpu.memory_space<vmem>>, vector<1x32xf32>
    %c1 = arith.constant 1 : index
    %c0_1 = arith.constant 0 : index
    %1 = vector.load %arg7[%c1, %c0_1] : memref<5x128xf32, #tpu.memory_space<vmem>>, vector<1x32xf32>
    %c2 = arith.constant 2 : index
    %c0_2 = arith.constant 0 : index
    %2 = vector.load %arg7[%c2, %c0_2] : memref<5x128xf32, #tpu.memory_space<vmem>>, vector<1x128xf32>
    %c3 = arith.constant 3 : index
    %c0_3 = arith.constant 0 : index
    %3 = vector.load %arg7[%c3, %c0_3] : memref<5x128xf32, #tpu.memory_space<vmem>>, vector<1x8xf32>
    %c4 = arith.constant 4 : index
    %c0_4 = arith.constant 0 : index
    %4 = vector.load %arg7[%c4, %c0_4] : memref<5x128xf32, #tpu.memory_space<vmem>>, vector<1x128xf32>
    %c0_5 = arith.constant 0 : index
    %c0_6 = arith.constant 0 : index
    %c0_7 = arith.constant 0 : index
    %c0_8 = arith.constant 0 : index
    %5 = vector.load %arg1[%c0_5, %c0_6, %c0_7, %c0_8] : memref<1x8x8x128xf32, #tpu.memory_space<vmem>>, vector<1x8x8x128xf32>
    %6 = vector.shape_cast %5 : vector<1x8x8x128xf32> to vector<64x128xf32>
    %c0_9 = arith.constant 0 : index
    %c0_10 = arith.constant 0 : index
    %7 = vector.load %arg2[%c0_9, %c0_10] : memref<128x32xf32, #tpu.memory_space<vmem>>, vector<128x32xf32>
    %cst = arith.constant dense<0.000000e+00> : vector<64x32xf32>
    %8 = tpu.matmul %6, %7, %cst {dimension_numbers = #tpu.dot_dimension_numbers<[1], [0], [0], [1], [0, 0, 1, 1], [], []>} : vector<64x128xf32>, vector<128x32xf32>, vector<64x32xf32> -> vector<64x32xf32>
    %9 = vector.broadcast %0 : vector<1x32xf32> to vector<64x32xf32>
    %10 = arith.addf %8, %9 : vector<64x32xf32>
    %cst_11 = arith.constant 0.000000e+00 : f32
    %11 = vector.broadcast %cst_11 : f32 to vector<64x32xf32>
    %12 = arith.maximumf %10, %11 : vector<64x32xf32>
    %cst_12 = arith.constant 0.000000e+00 : f32
    %13 = vector.broadcast %cst_12 : f32 to vector<1x1x10x32xf32>
    %cst_13 = arith.constant 0.000000e+00 : f32
    %14 = vector.broadcast %cst_13 : f32 to vector<1x8x1x32xf32>
    %c0_14 = arith.constant 0 : index
    %c0_15 = arith.constant 0 : index
    %c0_16 = arith.constant 0 : index
    %c0_17 = arith.constant 0 : index
    %15 = vector.load %arg9[%c0_14, %c0_15, %c0_16, %c0_17] : memref<1x10x10x32xf32, #tpu.memory_space<vmem>>, vector<1x1x10x32xf32>
    tpu.vector_store %arg9[%c0_14, %c0_15, %c0_16, %c0_17], %13 {strides = array<i32>} : memref<1x10x10x32xf32, #tpu.memory_space<vmem>>, vector<1x1x10x32xf32>,
    %c0_18 = arith.constant 0 : index
    %c9 = arith.constant 9 : index
    %c0_19 = arith.constant 0 : index
    %c0_20 = arith.constant 0 : index
    %16 = vector.load %arg9[%c0_18, %c9, %c0_19, %c0_20] : memref<1x10x10x32xf32, #tpu.memory_space<vmem>>, vector<1x1x10x32xf32>
    tpu.vector_store %arg9[%c0_18, %c9, %c0_19, %c0_20], %13 {strides = array<i32>} : memref<1x10x10x32xf32, #tpu.memory_space<vmem>>, vector<1x1x10x32xf32>,
    %c0_21 = arith.constant 0 : index
    %c1_22 = arith.constant 1 : index
    %c0_23 = arith.constant 0 : index
    %c0_24 = arith.constant 0 : index
    %17 = vector.load %arg9[%c0_21, %c1_22, %c0_23, %c0_24] : memref<1x10x10x32xf32, #tpu.memory_space<vmem>>, vector<1x8x1x32xf32>
    tpu.vector_store %arg9[%c0_21, %c1_22, %c0_23, %c0_24], %14 {strides = array<i32>} : memref<1x10x10x32xf32, #tpu.memory_space<vmem>>, vector<1x8x1x32xf32>,
    %c0_25 = arith.constant 0 : index
    %c1_26 = arith.constant 1 : index
    %c9_27 = arith.constant 9 : index
    %c0_28 = arith.constant 0 : index
    %18 = vector.load %arg9[%c0_25, %c1_26, %c9_27, %c0_28] : memref<1x10x10x32xf32, #tpu.memory_space<vmem>>, vector<1x8x1x32xf32>
    tpu.vector_store %arg9[%c0_25, %c1_26, %c9_27, %c0_28], %14 {strides = array<i32>} : memref<1x10x10x32xf32, #tpu.memory_space<vmem>>, vector<1x8x1x32xf32>,
    %19 = vector.shape_cast %12 : vector<64x32xf32> to vector<1x8x8x32xf32>
    %c0_29 = arith.constant 0 : index
    %c1_30 = arith.constant 1 : index
    %c1_31 = arith.constant 1 : index
    %c0_32 = arith.constant 0 : index
    %20 = vector.load %arg9[%c0_29, %c1_30, %c1_31, %c0_32] : memref<1x10x10x32xf32, #tpu.memory_space<vmem>>, vector<1x8x8x32xf32>
    tpu.vector_store %arg9[%c0_29, %c1_30, %c1_31, %c0_32], %19 {strides = array<i32>} : memref<1x10x10x32xf32, #tpu.memory_space<vmem>>, vector<1x8x8x32xf32>,
    %cst_33 = arith.constant 0.000000e+00 : f32
    %21 = vector.broadcast %cst_33 : f32 to vector<64x32xf32>
    %c0_34 = arith.constant 0 : index
    %c0_35 = arith.constant 0 : index
    %c0_36 = arith.constant 0 : index
    %c0_37 = arith.constant 0 : index
    %22 = vector.load %arg9[%c0_34, %c0_35, %c0_36, %c0_37] : memref<1x10x10x32xf32, #tpu.memory_space<vmem>>, vector<1x8x8x32xf32>
    %23 = vector.shape_cast %22 : vector<1x8x8x32xf32> to vector<64x32xf32>
    %c0_38 = arith.constant 0 : index
    %c0_39 = arith.constant 0 : index
    %c0_40 = arith.constant 0 : index
    %24 = vector.load %arg3[%c0_38, %c0_39, %c0_40] : memref<9x32x32xf32, #tpu.memory_space<vmem>>, vector<1x32x32xf32>
    %25 = vector.shape_cast %24 : vector<1x32x32xf32> to vector<32x32xf32>
    %cst_41 = arith.constant dense<0.000000e+00> : vector<64x32xf32>
    %26 = tpu.matmul %23, %25, %cst_41 {dimension_numbers = #tpu.dot_dimension_numbers<[1], [0], [0], [1], [0, 0, 1, 1], [], []>} : vector<64x32xf32>, vector<32x32xf32>, vector<64x32xf32> -> vector<64x32xf32>
    %27 = arith.addf %21, %26 : vector<64x32xf32>
    %c0_42 = arith.constant 0 : index
    %c0_43 = arith.constant 0 : index
    %c1_44 = arith.constant 1 : index
    %c0_45 = arith.constant 0 : index
    %28 = vector.load %arg9[%c0_42, %c0_43, %c1_44, %c0_45] : memref<1x10x10x32xf32, #tpu.memory_space<vmem>>, vector<1x8x8x32xf32>
    %29 = vector.shape_cast %28 : vector<1x8x8x32xf32> to vector<64x32xf32>
    %c1_46 = arith.constant 1 : index
    %c0_47 = arith.constant 0 : index
    %c0_48 = arith.constant 0 : index
    %30 = vector.load %arg3[%c1_46, %c0_47, %c0_48] : memref<9x32x32xf32, #tpu.memory_space<vmem>>, vector<1x32x32xf32>
    %31 = vector.shape_cast %30 : vector<1x32x32xf32> to vector<32x32xf32>
    %cst_49 = arith.constant dense<0.000000e+00> : vector<64x32xf32>
    %32 = tpu.matmul %29, %31, %cst_49 {dimension_numbers = #tpu.dot_dimension_numbers<[1], [0], [0], [1], [0, 0, 1, 1], [], []>} : vector<64x32xf32>, vector<32x32xf32>, vector<64x32xf32> -> vector<64x32xf32>
    %33 = arith.addf %27, %32 : vector<64x32xf32>
    %c0_50 = arith.constant 0 : index
    %c0_51 = arith.constant 0 : index
    %c2_52 = arith.constant 2 : index
    %c0_53 = arith.constant 0 : index
    %34 = vector.load %arg9[%c0_50, %c0_51, %c2_52, %c0_53] : memref<1x10x10x32xf32, #tpu.memory_space<vmem>>, vector<1x8x8x32xf32>
    %35 = vector.shape_cast %34 : vector<1x8x8x32xf32> to vector<64x32xf32>
    %c2_54 = arith.constant 2 : index
    %c0_55 = arith.constant 0 : index
    %c0_56 = arith.constant 0 : index
    %36 = vector.load %arg3[%c2_54, %c0_55, %c0_56] : memref<9x32x32xf32, #tpu.memory_space<vmem>>, vector<1x32x32xf32>
    %37 = vector.shape_cast %36 : vector<1x32x32xf32> to vector<32x32xf32>
    %cst_57 = arith.constant dense<0.000000e+00> : vector<64x32xf32>
    %38 = tpu.matmul %35, %37, %cst_57 {dimension_numbers = #tpu.dot_dimension_numbers<[1], [0], [0], [1], [0, 0, 1, 1], [], []>} : vector<64x32xf32>, vector<32x32xf32>, vector<64x32xf32> -> vector<64x32xf32>
    %39 = arith.addf %33, %38 : vector<64x32xf32>
    %c0_58 = arith.constant 0 : index
    %c1_59 = arith.constant 1 : index
    %c0_60 = arith.constant 0 : index
    %c0_61 = arith.constant 0 : index
    %40 = vector.load %arg9[%c0_58, %c1_59, %c0_60, %c0_61] : memref<1x10x10x32xf32, #tpu.memory_space<vmem>>, vector<1x8x8x32xf32>
    %41 = vector.shape_cast %40 : vector<1x8x8x32xf32> to vector<64x32xf32>
    %c3_62 = arith.constant 3 : index
    %c0_63 = arith.constant 0 : index
    %c0_64 = arith.constant 0 : index
    %42 = vector.load %arg3[%c3_62, %c0_63, %c0_64] : memref<9x32x32xf32, #tpu.memory_space<vmem>>, vector<1x32x32xf32>
    %43 = vector.shape_cast %42 : vector<1x32x32xf32> to vector<32x32xf32>
    %cst_65 = arith.constant dense<0.000000e+00> : vector<64x32xf32>
    %44 = tpu.matmul %41, %43, %cst_65 {dimension_numbers = #tpu.dot_dimension_numbers<[1], [0], [0], [1], [0, 0, 1, 1], [], []>} : vector<64x32xf32>, vector<32x32xf32>, vector<64x32xf32> -> vector<64x32xf32>
    %45 = arith.addf %39, %44 : vector<64x32xf32>
    %c0_66 = arith.constant 0 : index
    %c1_67 = arith.constant 1 : index
    %c1_68 = arith.constant 1 : index
    %c0_69 = arith.constant 0 : index
    %46 = vector.load %arg9[%c0_66, %c1_67, %c1_68, %c0_69] : memref<1x10x10x32xf32, #tpu.memory_space<vmem>>, vector<1x8x8x32xf32>
    %47 = vector.shape_cast %46 : vector<1x8x8x32xf32> to vector<64x32xf32>
    %c4_70 = arith.constant 4 : index
    %c0_71 = arith.constant 0 : index
    %c0_72 = arith.constant 0 : index
    %48 = vector.load %arg3[%c4_70, %c0_71, %c0_72] : memref<9x32x32xf32, #tpu.memory_space<vmem>>, vector<1x32x32xf32>
    %49 = vector.shape_cast %48 : vector<1x32x32xf32> to vector<32x32xf32>
    %cst_73 = arith.constant dense<0.000000e+00> : vector<64x32xf32>
    %50 = tpu.matmul %47, %49, %cst_73 {dimension_numbers = #tpu.dot_dimension_numbers<[1], [0], [0], [1], [0, 0, 1, 1], [], []>} : vector<64x32xf32>, vector<32x32xf32>, vector<64x32xf32> -> vector<64x32xf32>
    %51 = arith.addf %45, %50 : vector<64x32xf32>
    %c0_74 = arith.constant 0 : index
    %c1_75 = arith.constant 1 : index
    %c2_76 = arith.constant 2 : index
    %c0_77 = arith.constant 0 : index
    %52 = vector.load %arg9[%c0_74, %c1_75, %c2_76, %c0_77] : memref<1x10x10x32xf32, #tpu.memory_space<vmem>>, vector<1x8x8x32xf32>
    %53 = vector.shape_cast %52 : vector<1x8x8x32xf32> to vector<64x32xf32>
    %c5 = arith.constant 5 : index
    %c0_78 = arith.constant 0 : index
    %c0_79 = arith.constant 0 : index
    %54 = vector.load %arg3[%c5, %c0_78, %c0_79] : memref<9x32x32xf32, #tpu.memory_space<vmem>>, vector<1x32x32xf32>
    %55 = vector.shape_cast %54 : vector<1x32x32xf32> to vector<32x32xf32>
    %cst_80 = arith.constant dense<0.000000e+00> : vector<64x32xf32>
    %56 = tpu.matmul %53, %55, %cst_80 {dimension_numbers = #tpu.dot_dimension_numbers<[1], [0], [0], [1], [0, 0, 1, 1], [], []>} : vector<64x32xf32>, vector<32x32xf32>, vector<64x32xf32> -> vector<64x32xf32>
    %57 = arith.addf %51, %56 : vector<64x32xf32>
    %c0_81 = arith.constant 0 : index
    %c2_82 = arith.constant 2 : index
    %c0_83 = arith.constant 0 : index
    %c0_84 = arith.constant 0 : index
    %58 = vector.load %arg9[%c0_81, %c2_82, %c0_83, %c0_84] : memref<1x10x10x32xf32, #tpu.memory_space<vmem>>, vector<1x8x8x32xf32>
    %59 = vector.shape_cast %58 : vector<1x8x8x32xf32> to vector<64x32xf32>
    %c6 = arith.constant 6 : index
    %c0_85 = arith.constant 0 : index
    %c0_86 = arith.constant 0 : index
    %60 = vector.load %arg3[%c6, %c0_85, %c0_86] : memref<9x32x32xf32, #tpu.memory_space<vmem>>, vector<1x32x32xf32>
    %61 = vector.shape_cast %60 : vector<1x32x32xf32> to vector<32x32xf32>
    %cst_87 = arith.constant dense<0.000000e+00> : vector<64x32xf32>
    %62 = tpu.matmul %59, %61, %cst_87 {dimension_numbers = #tpu.dot_dimension_numbers<[1], [0], [0], [1], [0, 0, 1, 1], [], []>} : vector<64x32xf32>, vector<32x32xf32>, vector<64x32xf32> -> vector<64x32xf32>
    %63 = arith.addf %57, %62 : vector<64x32xf32>
    %c0_88 = arith.constant 0 : index
    %c2_89 = arith.constant 2 : index
    %c1_90 = arith.constant 1 : index
    %c0_91 = arith.constant 0 : index
    %64 = vector.load %arg9[%c0_88, %c2_89, %c1_90, %c0_91] : memref<1x10x10x32xf32, #tpu.memory_space<vmem>>, vector<1x8x8x32xf32>
    %65 = vector.shape_cast %64 : vector<1x8x8x32xf32> to vector<64x32xf32>
    %c7 = arith.constant 7 : index
    %c0_92 = arith.constant 0 : index
    %c0_93 = arith.constant 0 : index
    %66 = vector.load %arg3[%c7, %c0_92, %c0_93] : memref<9x32x32xf32, #tpu.memory_space<vmem>>, vector<1x32x32xf32>
    %67 = vector.shape_cast %66 : vector<1x32x32xf32> to vector<32x32xf32>
    %cst_94 = arith.constant dense<0.000000e+00> : vector<64x32xf32>
    %68 = tpu.matmul %65, %67, %cst_94 {dimension_numbers = #tpu.dot_dimension_numbers<[1], [0], [0], [1], [0, 0, 1, 1], [], []>} : vector<64x32xf32>, vector<32x32xf32>, vector<64x32xf32> -> vector<64x32xf32>
    %69 = arith.addf %63, %68 : vector<64x32xf32>
    %c0_95 = arith.constant 0 : index
    %c2_96 = arith.constant 2 : index
    %c2_97 = arith.constant 2 : index
    %c0_98 = arith.constant 0 : index
    %70 = vector.load %arg9[%c0_95, %c2_96, %c2_97, %c0_98] : memref<1x10x10x32xf32, #tpu.memory_space<vmem>>, vector<1x8x8x32xf32>
    %71 = vector.shape_cast %70 : vector<1x8x8x32xf32> to vector<64x32xf32>
    %c8 = arith.constant 8 : index
    %c0_99 = arith.constant 0 : index
    %c0_100 = arith.constant 0 : index
    %72 = vector.load %arg3[%c8, %c0_99, %c0_100] : memref<9x32x32xf32, #tpu.memory_space<vmem>>, vector<1x32x32xf32>
    %73 = vector.shape_cast %72 : vector<1x32x32xf32> to vector<32x32xf32>
    %cst_101 = arith.constant dense<0.000000e+00> : vector<64x32xf32>
    %74 = tpu.matmul %71, %73, %cst_101 {dimension_numbers = #tpu.dot_dimension_numbers<[1], [0], [0], [1], [0, 0, 1, 1], [], []>} : vector<64x32xf32>, vector<32x32xf32>, vector<64x32xf32> -> vector<64x32xf32>
    %75 = arith.addf %69, %74 : vector<64x32xf32>
    %76 = vector.broadcast %1 : vector<1x32xf32> to vector<64x32xf32>
    %77 = arith.addf %75, %76 : vector<64x32xf32>
    %cst_102 = arith.constant 0.000000e+00 : f32
    %78 = vector.broadcast %cst_102 : f32 to vector<64x32xf32>
    %79 = arith.maximumf %77, %78 : vector<64x32xf32>
    %c0_103 = arith.constant 0 : index
    %c0_104 = arith.constant 0 : index
    %80 = vector.load %arg4[%c0_103, %c0_104] : memref<32x128xf32, #tpu.memory_space<vmem>>, vector<32x128xf32>
    %cst_105 = arith.constant dense<0.000000e+00> : vector<64x128xf32>
    %81 = tpu.matmul %79, %80, %cst_105 {dimension_numbers = #tpu.dot_dimension_numbers<[1], [0], [0], [1], [0, 0, 1, 1], [], []>} : vector<64x32xf32>, vector<32x128xf32>, vector<64x128xf32> -> vector<64x128xf32>
    %82 = vector.broadcast %2 : vector<1x128xf32> to vector<64x128xf32>
    %83 = arith.addf %81, %82 : vector<64x128xf32>
    %84 = vector.shape_cast %83 : vector<64x128xf32> to vector<1x64x128xf32>
    %cst_106 = arith.constant dense<0.000000e+00> : vector<1x128xf32>
    %85 = vector.multi_reduction <add>, %84, %cst_106 [1] : vector<1x64x128xf32> to vector<1x128xf32>
    %cst_107 = arith.constant 6.400000e+01 : f32
    %86 = vector.broadcast %cst_107 : f32 to vector<1x128xf32>
    %87 = arith.divf %85, %86 : vector<1x128xf32>
    %c0_108 = arith.constant 0 : index
    %c0_109 = arith.constant 0 : index
    %88 = vector.load %arg5[%c0_108, %c0_109] : memref<128x8xf32, #tpu.memory_space<vmem>>, vector<128x8xf32>
    %cst_110 = arith.constant dense<0.000000e+00> : vector<1x8xf32>
    %89 = tpu.matmul %87, %88, %cst_110 {dimension_numbers = #tpu.dot_dimension_numbers<[1], [0], [0], [1], [0, 0, 1, 1], [], []>} : vector<1x128xf32>, vector<128x8xf32>, vector<1x8xf32> -> vector<1x8xf32>
    %90 = arith.addf %89, %3 : vector<1x8xf32>
    %cst_111 = arith.constant 0.000000e+00 : f32
    %91 = vector.broadcast %cst_111 : f32 to vector<1x8xf32>
    %92 = arith.maximumf %90, %91 : vector<1x8xf32>
    %c0_112 = arith.constant 0 : index
    %c0_113 = arith.constant 0 : index
    %93 = vector.load %arg6[%c0_112, %c0_113] : memref<8x128xf32, #tpu.memory_space<vmem>>, vector<8x128xf32>
    %cst_114 = arith.constant dense<0.000000e+00> : vector<1x128xf32>
    %94 = tpu.matmul %92, %93, %cst_114 {dimension_numbers = #tpu.dot_dimension_numbers<[1], [0], [0], [1], [0, 0, 1, 1], [], []>} : vector<1x8xf32>, vector<8x128xf32>, vector<1x128xf32> -> vector<1x128xf32>
    %95 = arith.addf %94, %4 : vector<1x128xf32>
    %96 = arith.negf %95 : vector<1x128xf32>
    %97 = math.exp %96 : vector<1x128xf32>
    %cst_115 = arith.constant 1.000000e+00 : f32
    %98 = vector.broadcast %cst_115 : f32 to vector<1x128xf32>
    %99 = arith.addf %98, %97 : vector<1x128xf32>
    %100 = arith.divf %98, %99 : vector<1x128xf32>
    %101 = vector.shape_cast %100 : vector<1x128xf32> to vector<1x1x128xf32>
    %102 = vector.broadcast %101 : vector<1x1x128xf32> to vector<1x64x128xf32>
    %103 = arith.mulf %84, %102 : vector<1x64x128xf32>
    %c0_116 = arith.constant 0 : index
    %c0_117 = arith.constant 0 : index
    %c0_118 = arith.constant 0 : index
    %c0_119 = arith.constant 0 : index
    %104 = vector.load %arg1[%c0_116, %c0_117, %c0_118, %c0_119] : memref<1x8x8x128xf32, #tpu.memory_space<vmem>>, vector<1x8x8x128xf32>
    %105 = vector.shape_cast %104 : vector<1x8x8x128xf32> to vector<1x64x128xf32>
    %106 = arith.addf %103, %105 : vector<1x64x128xf32>
    %cst_120 = arith.constant 0.000000e+00 : f32
    %107 = vector.broadcast %cst_120 : f32 to vector<1x64x128xf32>
    %108 = arith.maximumf %106, %107 : vector<1x64x128xf32>
    %109 = vector.shape_cast %108 : vector<1x64x128xf32> to vector<1x8x8x128xf32>
    %c0_121 = arith.constant 0 : index
    %c0_122 = arith.constant 0 : index
    %c0_123 = arith.constant 0 : index
    %c0_124 = arith.constant 0 : index
    %110 = vector.load %arg8[%c0_121, %c0_122, %c0_123, %c0_124] : memref<1x8x8x128xf32, #tpu.memory_space<vmem>>, vector<1x8x8x128xf32>
    tpu.vector_store %arg8[%c0_121, %c0_122, %c0_123, %c0_124], %109 {strides = array<i32>} : memref<1x8x8x128xf32, #tpu.memory_space<vmem>>, vector<1x8x8x128xf32>,
    return
  }
  func.func @transform_0(%arg0: i32) -> (i32, i32, i32, i32) {
    %c0_i32 = arith.constant 0 : i32
    %c0_i32_0 = arith.constant 0 : i32
    %c0_i32_1 = arith.constant 0 : i32
    %c0_i32_2 = arith.constant 0 : i32
    return %arg0, %c0_i32, %c0_i32_0, %c0_i32_1 : i32, i32, i32, i32
  }
  func.func @transform_1(%arg0: i32) -> (i32, i32) {
    %c0_i32 = arith.constant 0 : i32
    %c0_i32_0 = arith.constant 0 : i32
    %c0_i32_1 = arith.constant 0 : i32
    return %c0_i32, %c0_i32_0 : i32, i32
  }
  func.func @transform_2(%arg0: i32) -> (i32, i32, i32) {
    %c0_i32 = arith.constant 0 : i32
    %c0_i32_0 = arith.constant 0 : i32
    %c0_i32_1 = arith.constant 0 : i32
    %c0_i32_2 = arith.constant 0 : i32
    return %c0_i32, %c0_i32_0, %c0_i32_1 : i32, i32, i32
  }
  func.func @transform_3(%arg0: i32) -> (i32, i32) {
    %c0_i32 = arith.constant 0 : i32
    %c0_i32_0 = arith.constant 0 : i32
    %c0_i32_1 = arith.constant 0 : i32
    return %c0_i32, %c0_i32_0 : i32, i32
  }
  func.func @transform_4(%arg0: i32) -> (i32, i32) {
    %c0_i32 = arith.constant 0 : i32
    %c0_i32_0 = arith.constant 0 : i32
    %c0_i32_1 = arith.constant 0 : i32
    return %c0_i32, %c0_i32_0 : i32, i32
  }
  func.func @transform_5(%arg0: i32) -> (i32, i32) {
    %c0_i32 = arith.constant 0 : i32
    %c0_i32_0 = arith.constant 0 : i32
    %c0_i32_1 = arith.constant 0 : i32
    return %c0_i32, %c0_i32_0 : i32, i32
  }
  func.func @transform_6(%arg0: i32) -> (i32, i32) {
    %c0_i32 = arith.constant 0 : i32
    %c0_i32_0 = arith.constant 0 : i32
    %c0_i32_1 = arith.constant 0 : i32
    return %c0_i32, %c0_i32_0 : i32, i32
  }
  func.func @transform_7(%arg0: i32) -> (i32, i32, i32, i32) {
    %c0_i32 = arith.constant 0 : i32
    %c0_i32_0 = arith.constant 0 : i32
    %c0_i32_1 = arith.constant 0 : i32
    %c0_i32_2 = arith.constant 0 : i32
    return %arg0, %c0_i32, %c0_i32_0, %c0_i32_1 : i32, i32, i32, i32
  }
}

</mosaic_0001>

<llo_original>
// kernel: tpu_custom_call.1
$region0: #{tpu_custom_call.1}
  #allocation0 [shape = 'u32[]', space=smem, size = 0x4, offset = 0x4, fixed_abs, tag = 'smem constant byte address 0x4 - core index']
  #allocation1 [shape = 'u32[144,128]{1,0:T(1,128)}', space=vmem, size = 0x12000, scoped, tag = 'internal scratch']
  #allocation2 [shape = 'f32[1,10,10,32]{3,2,1,0:T(8,128)}', space=vmem, size = 0x14000, scoped, tag = 'scratch operand']
  %s0 = inlined_call_operand.hbm [shape: f32[2,8,8,128], index: 0, kind: input, shape index: {}]
  %s1 = inlined_call_operand.vmem [shape: f32[128,32], index: 1, kind: input, shape index: {}]
  %s2 = inlined_call_operand.vmem [shape: f32[9,32,32], index: 2, kind: input, shape index: {}]
  %s3 = inlined_call_operand.hbm [shape: f32[32,128], index: 3, kind: input, shape index: {}]
  %s4 = inlined_call_operand.vmem [shape: f32[128,8], index: 4, kind: input, shape index: {}]
  %s5 = inlined_call_operand.hbm [shape: f32[8,128], index: 5, kind: input, shape index: {}]
  %s6 = inlined_call_operand.vmem [shape: f32[5,128], index: 6, kind: input, shape index: {}]
  %s7 = inlined_call_operand.hbm [shape: f32[2,8,8,128], index: 7, kind: output, shape index: {}]
  %s8 = sld [smem:[#allocation0]]
  $region73: #{tpu_custom_call.1} parent=0
    _
  %s10 = ssub.s32 1, %s8
  %s11 = scalar_select 0, %s10, %s8
  $region1: #{tpu_custom_call.1} parent=0
    #allocation3 [shape = 'u8[65536]{0}', space=vmem, size = 0x10000, scoped, tag = 'input window, operand 0']
    #allocation4 [shape = 's32[2]{0}', space=sflag, size = 0x8, scoped, tag = 'scoped memory for tpu_custom_call.1']
    #allocation5 [shape = 's32[2]{0}', space=sflag, size = 0x8, scoped, tag = 'scoped memory for tpu_custom_call.1']
    #allocation6 [shape = 'u8[16384]{0}', space=vmem, size = 0x4000, scoped, tag = 'input window, operand 3, single buffered']
    #allocation7 [shape = 's32[1]{0}', space=sflag, size = 0x4, scoped, tag = 'scoped memory for tpu_custom_call.1']
    #allocation8 [shape = 'u8[4096]{0}', space=vmem, size = 0x1000, scoped, tag = 'input window, operand 5, single buffered']
    #allocation9 [shape = 'u8[65536]{0}', space=vmem, size = 0x10000, scoped, tag = 'output window, operand 0']
    %12 = vsyncpa [#allocation4], 0
    %s13 = scalar_lea.sflag [#allocation4], 1
    %14 = vsyncpa %s13, 0
    %15 = vsyncpa [#allocation7], 0
    %16 = vsyncpa [#allocation5], 0
    %s17 = scalar_lea.sflag [#allocation5], 1
    %18 = vsyncpa %s17, 0
    loop: start=0, step=1, limit=4
    $region2: #{tpu_custom_call.1} parent=1 // loop_pre_header
      _
    $region3: #{tpu_custom_call.1} parent=1 // loop_header
      %s20 = sphi 0, %s24
      %p21 = scmp.ge.s32.totalorder %s20, 4
      %s30 = sphi 0, %s32
      %s33 = sphi 0, %s30
      %s34 = sphi 0, %s33
      %s50 = sphi 0, %s34
      %s54 = sphi 0, %s54
      %s56 = sphi 0, %s54
      %s57 = sphi 0, %s56
      %s71 = sphi 0, %s57
      %s75 = sphi 0, %s75
      %s77 = sphi 0, %s75
      %s78 = sphi 0, %s77
      %s92 = sphi 0, %s78
      %s96 = sphi 0, %s96
      %s98 = sphi 0, %s96
      %s99 = sphi 0, %s98
      %s113 = sphi 0, %s99
      %s117 = sphi 0, %s117
      %s119 = sphi 0, %s117
      %s120 = sphi 0, %s119
      %s134 = sphi 0, %s120
      %s138 = sphi 0, %s138
      %s140 = sphi 0, %s138
      %s141 = sphi 0, %s140
      %s155 = sphi 0, %s141
      %s159 = sphi 0, %s159
      %s161 = sphi 0, %s159
      %s162 = sphi 0, %s161
      %s176 = sphi 0, %s162
      %s182 = sphi 0, %s184
      %s185 = sphi 0, %s182
      %s186 = sphi 0, %s185
      %s202 = sphi 0, %s186
    $region4: #{tpu_custom_call.1} parent=1 // loop_header_branch
      %23 = sbr.rel (%p21) target = $region8
    $region5: #{tpu_custom_call.1} parent=1 // loop_body
      %s25 = ssub.s32 %s20, 1
      %s26 = ssub.s32 %s20, 2
      %s27 = sadd.s32 %s20, 1
      %s28 = ssub.s32 %s20, %s27
      %p29 = scmp.eq.s32.totalorder %s28, 0
      %s31 = sadd.s32 %s30, 1
      %s32 = scalar_select %p29, %s30, %s31
      %p35 = pneg %p29
      %p36 = scmp.eq.s32.totalorder %s20, 1
      %p37 = por %p35, %p36
      %p38 = scmp.ne.s32.totalorder %s30, %s33
      %p39 = scmp.eq.s32.totalorder %s20, 0
      %p40 = por %p38, %p39
      %p41 = scmp.ne.s32.totalorder %s30, %s33
      %p42 = scmp.eq.s32.totalorder %s25, 1
      %p43 = por %p41, %p42
      %p44 = scmp.ne.s32.totalorder %s33, %s34
      %p45 = scmp.eq.s32.totalorder %s25, 0
      %p46 = por %p44, %p45
      %p47 = scmp.ne.s32.totalorder %s33, %s34
      %p48 = scmp.eq.s32.totalorder %s26, 1
      %p49 = por %p47, %p48
      %p51 = scmp.ne.s32.totalorder %s34, %s50
      %p52 = scmp.eq.s32.totalorder %s26, 0
      %p53 = por %p51, %p52
      %s55 = sadd.s32 %s54, 1
      %p58 = scmp.eq.s32.totalorder %s20, 1
      %p59 = scmp.ne.s32.totalorder %s54, %s56
      %p60 = scmp.eq.s32.totalorder %s20, 0
      %p61 = por %p59, %p60
      %p62 = scmp.ne.s32.totalorder %s54, %s56
      %p63 = scmp.eq.s32.totalorder %s25, 1
      %p64 = por %p62, %p63
      %p65 = scmp.ne.s32.totalorder %s56, %s57
      %p66 = scmp.eq.s32.totalorder %s25, 0
      %p67 = por %p65, %p66
      %p68 = scmp.ne.s32.totalorder %s56, %s57
      %p69 = scmp.eq.s32.totalorder %s26, 1
      %p70 = por %p68, %p69
      %p72 = scmp.ne.s32.totalorder %s57, %s71
      %p73 = scmp.eq.s32.totalorder %s26, 0
      %p74 = por %p72, %p73
      %s76 = sadd.s32 %s75, 1
      %p79 = scmp.eq.s32.totalorder %s20, 1
      %p80 = scmp.ne.s32.totalorder %s75, %s77
      %p81 = scmp.eq.s32.totalorder %s20, 0
      %p82 = por %p80, %p81
      %p83 = scmp.ne.s32.totalorder %s75, %s77
      %p84 = scmp.eq.s32.totalorder %s25, 1
      %p85 = por %p83, %p84
      %p86 = scmp.ne.s32.totalorder %s77, %s78
      %p87 = scmp.eq.s32.totalorder %s25, 0
      %p88 = por %p86, %p87
      %p89 = scmp.ne.s32.totalorder %s77, %s78
      %p90 = scmp.eq.s32.totalorder %s26, 1
      %p91 = por %p89, %p90
      %p93 = scmp.ne.s32.totalorder %s78, %s92
      %p94 = scmp.eq.s32.totalorder %s26, 0
      %p95 = por %p93, %p94
      %s97 = sadd.s32 %s96, 1
      %p100 = scmp.eq.s32.totalorder %s20, 1
      %p101 = scmp.ne.s32.totalorder %s96, %s98
      %p102 = scmp.eq.s32.totalorder %s20, 0
      %p103 = por %p101, %p102
      %p104 = scmp.ne.s32.totalorder %s96, %s98
      %p105 = scmp.eq.s32.totalorder %s25, 1
      %p106 = por %p104, %p105
      %p107 = scmp.ne.s32.totalorder %s98, %s99
      %p108 = scmp.eq.s32.totalorder %s25, 0
      %p109 = por %p107, %p108
      %p110 = scmp.ne.s32.totalorder %s98, %s99
      %p111 = scmp.eq.s32.totalorder %s26, 1
      %p112 = por %p110, %p111
      %p114 = scmp.ne.s32.totalorder %s99, %s113
      %p115 = scmp.eq.s32.totalorder %s26, 0
      %p116 = por %p114, %p115
      %s118 = sadd.s32 %s117, 1
      %p121 = scmp.eq.s32.totalorder %s20, 1
      %p122 = scmp.ne.s32.totalorder %s117, %s119
      %p123 = scmp.eq.s32.totalorder %s20, 0
      %p124 = por %p122, %p123
      %p125 = scmp.ne.s32.totalorder %s117, %s119
      %p126 = scmp.eq.s32.totalorder %s25, 1
      %p127 = por %p125, %p126
      %p128 = scmp.ne.s32.totalorder %s119, %s120
      %p129 = scmp.eq.s32.totalorder %s25, 0
      %p130 = por %p128, %p129
      %p131 = scmp.ne.s32.totalorder %s119, %s120
      %p132 = scmp.eq.s32.totalorder %s26, 1
      %p133 = por %p131, %p132
      %p135 = scmp.ne.s32.totalorder %s120, %s134
      %p136 = scmp.eq.s32.totalorder %s26, 0
      %p137 = por %p135, %p136
      %s139 = sadd.s32 %s138, 1
      %p142 = scmp.eq.s32.totalorder %s20, 1
      %p143 = scmp.ne.s32.totalorder %s138, %s140
      %p144 = scmp.eq.s32.totalorder %s20, 0
      %p145 = por %p143, %p144
      %p146 = scmp.ne.s32.totalorder %s138, %s140
      %p147 = scmp.eq.s32.totalorder %s25, 1
      %p148 = por %p146, %p147
      %p149 = scmp.ne.s32.totalorder %s140, %s141
      %p150 = scmp.eq.s32.totalorder %s25, 0
      %p151 = por %p149, %p150
      %p152 = scmp.ne.s32.totalorder %s140, %s141
      %p153 = scmp.eq.s32.totalorder %s26, 1
      %p154 = por %p152, %p153
      %p156 = scmp.ne.s32.totalorder %s141, %s155
      %p157 = scmp.eq.s32.totalorder %s26, 0
      %p158 = por %p156, %p157
      %s160 = sadd.s32 %s159, 1
      %p163 = scmp.eq.s32.totalorder %s20, 1
      %p164 = scmp.ne.s32.totalorder %s159, %s161
      %p165 = scmp.eq.s32.totalorder %s20, 0
      %p166 = por %p164, %p165
      %p167 = scmp.ne.s32.totalorder %s159, %s161
      %p168 = scmp.eq.s32.totalorder %s25, 1
      %p169 = por %p167, %p168
      %p170 = scmp.ne.s32.totalorder %s161, %s162
      %p171 = scmp.eq.s32.totalorder %s25, 0
      %p172 = por %p170, %p171
      %p173 = scmp.ne.s32.totalorder %s161, %s162
      %p174 = scmp.eq.s32.totalorder %s26, 1
      %p175 = por %p173, %p174
      %p177 = scmp.ne.s32.totalorder %s162, %s176
      %p178 = scmp.eq.s32.totalorder %s26, 0
      %p179 = por %p177, %p178
      %s180 = ssub.s32 %s20, %s27
      %p181 = scmp.eq.s32.totalorder %s180, 0
      %s183 = sadd.s32 %s182, 1
      %s184 = scalar_select %p181, %s182, %s183
      %p187 = pneg %p181
      %p188 = scmp.eq.s32.totalorder %s20, 1
      %p189 = por %p187, %p188
      %p190 = scmp.ne.s32.totalorder %s182, %s185
      %p191 = scmp.eq.s32.totalorder %s20, 0
      %p192 = por %p190, %p191
      %p193 = scmp.ne.s32.totalorder %s182, %s185
      %p194 = scmp.eq.s32.totalorder %s25, 1
      %p195 = por %p193, %p194
      %p196 = scmp.ne.s32.totalorder %s185, %s186
      %p197 = scmp.eq.s32.totalorder %s25, 0
      %p198 = por %p196, %p197
      %p199 = scmp.ne.s32.totalorder %s185, %s186
      %p200 = scmp.eq.s32.totalorder %s26, 1
      %p201 = por %p199, %p200
      %p203 = scmp.ne.s32.totalorder %s186, %s202
      %p204 = scmp.eq.s32.totalorder %s26, 0
      %p205 = por %p203, %p204
      %p206 = scmp.le.s32.totalorder 1, %s20
      %p207 = scmp.lt.s32.totalorder %s20, 3
      %p208 = pnand %p206, %p207
      %p209 = pneg %p208
      // Predicated region
      $region9: #{tpu_custom_call.1} parent=5 // pred_check
        _
      $region10: #{tpu_custom_call.1} parent=5 // pred_check_branch
        %211 = sbr.rel (%p208) target = $region12
      $region11: #{tpu_custom_call.1} parent=5 // pred_region
        %s212 = ssub.s32 %s20, 1
        // Predicated region
        $region13: #{tpu_custom_call.1} parent=11 // pred_check
          %p213 = pneg %p67
        $region14: #{tpu_custom_call.1} parent=11 // pred_check_branch
          %215 = sbr.rel (%p213) target = $region16
        $region15: #{tpu_custom_call.1} parent=11 // pred_region
          _
        $region16: #{tpu_custom_call.1} parent=11 // pred_fallthru
          _
        // Predicated region
        $region17: #{tpu_custom_call.1} parent=11 // pred_check
          %p216 = pneg %p88
        $region18: #{tpu_custom_call.1} parent=11 // pred_check_branch
          %218 = sbr.rel (%p216) target = $region20
        $region19: #{tpu_custom_call.1} parent=11 // pred_region
          _
        $region20: #{tpu_custom_call.1} parent=11 // pred_fallthru
          _
        // Predicated region
        $region21: #{tpu_custom_call.1} parent=11 // pred_check
          %p219 = pneg %p109
        $region22: #{tpu_custom_call.1} parent=11 // pred_check_branch
          %221 = sbr.rel (%p219) target = $region24
        $region23: #{tpu_custom_call.1} parent=11 // pred_region
          %s223 = ssub.s32 512, 512
          %224 = vsyncadd [#allocation7], %s223
          %s225 = sshll.u32 [#allocation6], 4
          %s226 = int_to_ptr.vmem [resolvable:$true] %s225
          %231 = dma.hbm_to_vmem [thread:$0]  %s3, 512, %s226, [#allocation7], 128, 128, 8
        $region24: #{tpu_custom_call.1} parent=11 // pred_fallthru
          _
        // Predicated region
        $region25: #{tpu_custom_call.1} parent=11 // pred_check
          %p232 = pneg %p130
        $region26: #{tpu_custom_call.1} parent=11 // pred_check_branch
          %234 = sbr.rel (%p232) target = $region28
        $region27: #{tpu_custom_call.1} parent=11 // pred_region
          _
        $region28: #{tpu_custom_call.1} parent=11 // pred_fallthru
          _
        // Predicated region
        $region29: #{tpu_custom_call.1} parent=11 // pred_check
          %p235 = pneg %p151
        $region30: #{tpu_custom_call.1} parent=11 // pred_check_branch
          %237 = sbr.rel (%p235) target = $region32
        $region31: #{tpu_custom_call.1} parent=11 // pred_region
          %s239 = ssub.s32 128, 128
          %240 = vsyncadd [#allocation7], %s239
          %s242 = sshll.u32 [#allocation8], 4
          %s243 = int_to_ptr.vmem [resolvable:$true] %s242
          %245 = dma.hbm_to_vmem [thread:$0]  %s5, 128, %s243, [#allocation7]
        $region32: #{tpu_custom_call.1} parent=11 // pred_fallthru
          _
        // Predicated region
        $region33: #{tpu_custom_call.1} parent=11 // pred_check
          %p246 = pneg %p172
        $region34: #{tpu_custom_call.1} parent=11 // pred_check_branch
          %248 = sbr.rel (%p246) target = $region36
        $region35: #{tpu_custom_call.1} parent=11 // pred_region
          _
        $region36: #{tpu_custom_call.1} parent=11 // pred_fallthru
          _
      $region12: #{tpu_custom_call.1} parent=5 // pred_fallthru
        _
      %p249 = scmp.lt.s32.totalorder %s20, 2
      // Predicated region
      $region37: #{tpu_custom_call.1} parent=5 // pred_check
        %p250 = pneg %p249
      $region38: #{tpu_custom_call.1} parent=5 // pred_check_branch
        %252 = sbr.rel (%p250) target = $region40
      $region39: #{tpu_custom_call.1} parent=5 // pred_region
        // Predicated region
        $region41: #{tpu_custom_call.1} parent=39 // pred_check
          %p253 = pneg %p40
        $region42: #{tpu_custom_call.1} parent=39 // pred_check_branch
          %255 = sbr.rel (%p253) target = $region44
        $region43: #{tpu_custom_call.1} parent=39 // pred_region
          %s256 = sand.u32 %s30, 1
          %s257 = scalar_lea.sflag [#allocation4], %s256
          %s258 = sand.u32 %s30, 1
          %s259 = smul.addr %s258, 64
          %s260 = scalar_lea.vmem [#allocation3], %s259
          %s262 = ssub.s32 1024, 1024
          %263 = vsyncadd %s257, %s262
          %s264 = smul.addr %s20, 8
          %s265 = smul.addr %s264, 128
          %s266 = scalar_lea.hbm %s0, %s265
          %s267 = sshll.u32 %s260, 4
          %s268 = int_to_ptr.vmem [resolvable:$true] %s267
          %273 = dma.hbm_to_vmem [thread:$0]  %s266, 1024, %s268, %s257, 128, 128, 8
        $region44: #{tpu_custom_call.1} parent=39 // pred_fallthru
          _
      $region40: #{tpu_custom_call.1} parent=5 // pred_fallthru
        _
      %p274 = scmp.le.s32.totalorder 1, %s20
      %p275 = scmp.lt.s32.totalorder %s20, 3
      %p276 = pnand %p274, %p275
      %p277 = pneg %p276
      // Predicated region
      $region45: #{tpu_custom_call.1} parent=5 // pred_check
        _
      $region46: #{tpu_custom_call.1} parent=5 // pred_check_branch
        %279 = sbr.rel (%p276) target = $region48
      $region47: #{tpu_custom_call.1} parent=5 // pred_region
        %s280 = ssub.s32 %s20, 1
        %s281 = sand.u32 %s33, 1
        %s282 = scalar_lea.sflag [#allocation4], %s281
        %s283 = sand.u32 %s33, 1
        %s284 = smul.addr %s283, 64
        %s285 = scalar_lea.vmem [#allocation3], %s284
        // Predicated region
        $region49: #{tpu_custom_call.1} parent=47 // pred_check
          %p286 = pneg %p46
        $region50: #{tpu_custom_call.1} parent=47 // pred_check_branch
          %288 = sbr.rel (%p286) target = $region52
        $region51: #{tpu_custom_call.1} parent=47 // pred_region
          %289 = dma.done %s282, 1024
        $region52: #{tpu_custom_call.1} parent=47 // pred_fallthru
          _
        // Predicated region
        $region53: #{tpu_custom_call.1} parent=47 // pred_check
          %p290 = pneg %p109
        $region54: #{tpu_custom_call.1} parent=47 // pred_check_branch
          %292 = sbr.rel (%p290) target = $region56
        $region55: #{tpu_custom_call.1} parent=47 // pred_region
          %293 = dma.done [#allocation7], 512
        $region56: #{tpu_custom_call.1} parent=47 // pred_fallthru
          _
        // Predicated region
        $region57: #{tpu_custom_call.1} parent=47 // pred_check
          %p294 = pneg %p151
        $region58: #{tpu_custom_call.1} parent=47 // pred_check_branch
          %296 = sbr.rel (%p294) target = $region60
        $region59: #{tpu_custom_call.1} parent=47 // pred_region
          %297 = dma.done [#allocation7], 128
        $region60: #{tpu_custom_call.1} parent=47 // pred_fallthru
          _
        %s298 = sand.u32 %s33, 1
        %s299 = scalar_lea.sflag [#allocation4], %s298
        %s300 = sand.u32 %s33, 1
        %s301 = smul.addr %s300, 64
        %s302 = scalar_lea.vmem [#allocation3], %s301
        %p303 = pneg %p46
        %p304 = pneg %p43
        %p305 = pneg %p67
        %p306 = pneg %p64
        %p307 = pneg %p88
        %p308 = pneg %p85
        %p309 = pneg %p109
        %p310 = pneg %p106
        %p311 = pneg %p130
        %p312 = pneg %p127
        %p313 = pneg %p151
        %p314 = pneg %p148
        %p315 = pneg %p172
        %p316 = pneg %p169
        %p317 = pneg %p198
        %p318 = pneg %p195
        %s319 = sand.u32 %s185, 1
        %s320 = scalar_lea.sflag [#allocation5], %s319
        %s321 = sand.u32 %s185, 1
        %s322 = smul.addr %s321, 64
        %s323 = scalar_lea.vmem [#allocation9], %s322
        %v324 = vld [vmem:[%s6] sm:$0x1]
        %v325 = vld [vmem:[%s6 + $0x1] sm:$0x1]
        %v326 = vld [vmem:[%s6 + $0x2] sm:$0x1]
        %v327 = vld [vmem:[%s6 + $0x3] sm:$0x1]
        %v328 = vld [vmem:[%s6 + $0x4] sm:$0x1]
        %v329 = vld [vmem:[%s285] sm:$0xff]
        %v330 = vld [vmem:[%s285 + $0x8] sm:$0xff]
        %v331 = vld [vmem:[%s285 + $0x10] sm:$0xff]
        %v332 = vld [vmem:[%s285 + $0x18] sm:$0xff]
        %v333 = vld [vmem:[%s285 + $0x20] sm:$0xff]
        %v334 = vld [vmem:[%s285 + $0x28] sm:$0xff]
        %v335 = vld [vmem:[%s285 + $0x30] sm:$0xff]
        %v336 = vld [vmem:[%s285 + $0x38] sm:$0xff]
        %v337 = vld [vmem:[%s1] sm:$0xff]
        %v338 = vld [vmem:[%s1 + $0x8] sm:$0xff]
        %v339 = vld [vmem:[%s1 + $0x10] sm:$0xff]
        %v340 = vld [vmem:[%s1 + $0x18] sm:$0xff]
        %v341 = vld [vmem:[%s1 + $0x20] sm:$0xff]
        %v342 = vld [vmem:[%s1 + $0x28] sm:$0xff]
        %v343 = vld [vmem:[%s1 + $0x30] sm:$0xff]
        %v344 = vld [vmem:[%s1 + $0x38] sm:$0xff]
        %v345 = vld [vmem:[%s1 + $0x40] sm:$0xff]
        %v346 = vld [vmem:[%s1 + $0x48] sm:$0xff]
        %v347 = vld [vmem:[%s1 + $0x50] sm:$0xff]
        %v348 = vld [vmem:[%s1 + $0x58] sm:$0xff]
        %v349 = vld [vmem:[%s1 + $0x60] sm:$0xff]
        %v350 = vld [vmem:[%s1 + $0x68] sm:$0xff]
        %v351 = vld [vmem:[%s1 + $0x70] sm:$0xff]
        %v352 = vld [vmem:[%s1 + $0x78] sm:$0xff]
        %v353 = vlaneseq
        %v354 = vshrl.u32 %v353, 7
        %v355 = vsub.s32 0, %v354
        %v356 = vrot.slane %v324, %v355
        %357 = vmatprep.subr.mxu0 0.0
        %358 = vmatpush1.msra.mxu0 %v352
        %359 = vmatprep.subr.mxu0 0.0
        %360 = vmatpush1.msra.mxu0 %v351
        %361 = vmatprep.subr.mxu0 0.0
        %362 = vmatpush1.msra.mxu0 %v350
        %363 = vmatprep.subr.mxu0 0.0
        %364 = vmatpush1.msra.mxu0 %v349
        %365 = vmatprep.subr.mxu0 0.0
        %366 = vmatpush1.msra.mxu0 %v348
        %367 = vmatprep.subr.mxu0 0.0
        %368 = vmatpush1.msra.mxu0 %v347
        %369 = vmatprep.subr.mxu0 0.0
        %370 = vmatpush1.msra.mxu0 %v346
        %371 = vmatprep.subr.mxu0 0.0
        %372 = vmatpush1.msra.mxu0 %v345
        %373 = vmatprep.subr.mxu0 0.0
        %374 = vmatpush1.msra.mxu0 %v344
        %375 = vmatprep.subr.mxu0 0.0
        %376 = vmatpush1.msra.mxu0 %v343
        %377 = vmatprep.subr.mxu0 0.0
        %378 = vmatpush1.msra.mxu0 %v342
        %379 = vmatprep.subr.mxu0 0.0
        %380 = vmatpush1.msra.mxu0 %v341
        %381 = vmatprep.subr.mxu0 0.0
        %382 = vmatpush1.msra.mxu0 %v340
        %383 = vmatprep.subr.mxu0 0.0
        %384 = vmatpush1.msra.mxu0 %v339
        %385 = vmatprep.subr.mxu0 0.0
        %386 = vmatpush1.msra.mxu0 %v338
        %387 = vmatprep.subr.mxu0 0.0
        %388 = vmatpush1.msra.mxu0 %v337
        %389 = vmatprep.subr.mxu0 0.0
        %390 = vmatpush2.msra.mxu0 0.0
        %391 = vmatprep.subr.mxu0 0.0
        %392 = vmatpush2.msra.mxu0 0.0
        %393 = vmatprep.subr.mxu0 0.0
        %394 = vmatpush2.msra.mxu0 0.0
        %395 = vmatprep.subr.mxu0 0.0
        %396 = vmatpush2.msra.mxu0 0.0
        %397 = vmatprep.subr.mxu0 0.0
        %398 = vmatpush2.msra.mxu0 0.0
        %399 = vmatprep.subr.mxu0 0.0
        %400 = vmatpush2.msra.mxu0 0.0
        %401 = vmatprep.subr.mxu0 0.0
        %402 = vmatpush2.msra.mxu0 0.0
        %403 = vmatprep.subr.mxu0 0.0
        %404 = vmatpush2.msra.mxu0 0.0
        %405 = vmatprep.subr.mxu0 0.0
        %406 = vmatpush2.msra.mxu0 0.0
        %407 = vmatprep.subr.mxu0 0.0
        %408 = vmatpush2.msra.mxu0 0.0
        %409 = vmatprep.subr.mxu0 0.0
        %410 = vmatpush2.msra.mxu0 0.0
        %411 = vmatprep.subr.mxu0 0.0
        %412 = vmatpush2.msra.mxu0 0.0
        %413 = vmatprep.subr.mxu0 0.0
        %414 = vmatpush2.msra.mxu0 0.0
        %415 = vmatprep.subr.mxu0 0.0
        %416 = vmatpush2.msra.mxu0 0.0
        %417 = vmatprep.subr.mxu0 0.0
        %418 = vmatpush2.msra.mxu0 0.0
        %419 = vmatprep.subr.mxu0 0.0
        %420 = vmatpush2.msra.mxu0 0.0
        %421 = vmatprep.mubr.f32.mxu0 0.0
        %422 = vmatmul.mubr.f32.gmra.mxu0 %v329
        %v423 = vpop.f32.mrf.mxu0
        %v424 = vadd.f32 %v356, %v423
        %v425 = vpop.f32.mrf.mxu0
        %426 = vmatprep.mubr.f32.mxu0 0.0
        %427 = vmatmul.mubr.f32.gmra.mxu0 %v330
        %v428 = vpop.f32.mrf.mxu0
        %v429 = vadd.f32 %v356, %v428
        %v430 = vpop.f32.mrf.mxu0
        %431 = vmatprep.mubr.f32.mxu0 0.0
        %432 = vmatmul.mubr.f32.gmra.mxu0 %v331
        %v433 = vpop.f32.mrf.mxu0
        %v434 = vadd.f32 %v356, %v433
        %v435 = vpop.f32.mrf.mxu0
        %436 = vmatprep.mubr.f32.mxu0 0.0
        %437 = vmatmul.mubr.f32.gmra.mxu0 %v332
        %v438 = vpop.f32.mrf.mxu0
        %v439 = vadd.f32 %v356, %v438
        %v440 = vpop.f32.mrf.mxu0
        %441 = vmatprep.mubr.f32.mxu0 0.0
        %442 = vmatmul.mubr.f32.gmra.mxu0 %v333
        %v443 = vpop.f32.mrf.mxu0
        %v444 = vadd.f32 %v356, %v443
        %v445 = vpop.f32.mrf.mxu0
        %446 = vmatprep.mubr.f32.mxu0 0.0
        %447 = vmatmul.mubr.f32.gmra.mxu0 %v334
        %v448 = vpop.f32.mrf.mxu0
        %v449 = vadd.f32 %v356, %v448
        %v450 = vpop.f32.mrf.mxu0
        %451 = vmatprep.mubr.f32.mxu0 0.0
        %452 = vmatmul.mubr.f32.gmra.mxu0 %v335
        %v453 = vpop.f32.mrf.mxu0
        %v454 = vadd.f32 %v356, %v453
        %v455 = vpop.f32.mrf.mxu0
        %456 = vmatprep.mubr.f32.mxu0 0.0
        %457 = vmatmul.mubr.f32.gmra.mxu0 %v336
        %v458 = vpop.f32.mrf.mxu0
        %v459 = vadd.f32 %v356, %v458
        %v460 = vpop.f32.mrf.mxu0
        %461 = vdwg.mxu0
        %v462 = vmax.f32 %v424, 0.0
        %v463 = vmax.f32 %v429, 0.0
        %v464 = vmax.f32 %v434, 0.0
        %v465 = vmax.f32 %v439, 0.0
        %v466 = vmax.f32 %v444, 0.0
        %v467 = vmax.f32 %v449, 0.0
        %v468 = vmax.f32 %v454, 0.0
        %v469 = vmax.f32 %v459, 0.0
        %vm470 = vcmask 261120
        %471 = vst.msk [vmem:[#allocation2] sm:$0xff] %vm470, 0.0
        %vm472 = vcmask 254976
        %473 = vst.msk [vmem:[#allocation2 + $0x8] sm:$0x3] %vm472, 0.0
        %s474 = scalar_lea.vmem [#allocation2], 144
        %475 = vst.msk [vmem:[%s474] sm:$0xff] %vm470, 0.0
        %476 = vst.msk [vmem:[%s474 + $0x8] sm:$0x3] %vm472, 0.0
        %s477 = scalar_lea.vmem [#allocation2], 16
        %vm478 = vcmask 253952
        %479 = vst.msk [vmem:[%s477] sm:$0x1] %vm478, 0.0
        %480 = vst.msk [vmem:[%s477 + $0x10] sm:$0x1] %vm478, 0.0
        %481 = vst.msk [vmem:[%s477 + $0x20] sm:$0x1] %vm478, 0.0
        %482 = vst.msk [vmem:[%s477 + $0x30] sm:$0x1] %vm478, 0.0
        %483 = vst.msk [vmem:[%s477 + $0x40] sm:$0x1] %vm478, 0.0
        %484 = vst.msk [vmem:[%s477 + $0x50] sm:$0x1] %vm478, 0.0
        %485 = vst.msk [vmem:[%s477 + $0x60] sm:$0x1] %vm478, 0.0
        %486 = vst.msk [vmem:[%s477 + $0x70] sm:$0x1] %vm478, 0.0
        %487 = vst.msk [vmem:[%s477 + $0x9] sm:$0x1] %vm478, 0.0
        %488 = vst.msk [vmem:[%s477 + $0x19] sm:$0x1] %vm478, 0.0
        %489 = vst.msk [vmem:[%s477 + $0x29] sm:$0x1] %vm478, 0.0
        %490 = vst.msk [vmem:[%s477 + $0x39] sm:$0x1] %vm478, 0.0
        %491 = vst.msk [vmem:[%s477 + $0x49] sm:$0x1] %vm478, 0.0
        %492 = vst.msk [vmem:[%s477 + $0x59] sm:$0x1] %vm478, 0.0
        %493 = vst.msk [vmem:[%s477 + $0x69] sm:$0x1] %vm478, 0.0
        %494 = vst.msk [vmem:[%s477 + $0x79] sm:$0x1] %vm478, 0.0
        %495 = vst.msk [vmem:[%s477 + $0x1] sm:$0xff] %vm470, %v462
        %496 = vst.msk [vmem:[%s477 + $0x11] sm:$0xff] %vm470, %v463
        %497 = vst.msk [vmem:[%s477 + $0x21] sm:$0xff] %vm470, %v464
        %498 = vst.msk [vmem:[%s477 + $0x31] sm:$0xff] %vm470, %v465
        %499 = vst.msk [vmem:[%s477 + $0x41] sm:$0xff] %vm470, %v466
        %500 = vst.msk [vmem:[%s477 + $0x51] sm:$0xff] %vm470, %v467
        %501 = vst.msk [vmem:[%s477 + $0x61] sm:$0xff] %vm470, %v468
        %502 = vst.msk [vmem:[%s477 + $0x71] sm:$0xff] %vm470, %v469
        %v503 = vld [vmem:[#allocation2] sm:$0xff]
        %v504 = vld [vmem:[#allocation2 + $0x10] sm:$0xff]
        %v505 = vld [vmem:[#allocation2 + $0x20] sm:$0xff]
        %v506 = vld [vmem:[#allocation2 + $0x30] sm:$0xff]
        %v507 = vld [vmem:[#allocation2 + $0x40] sm:$0xff]
        %v508 = vld [vmem:[#allocation2 + $0x50] sm:$0xff]
        %v509 = vld [vmem:[#allocation2 + $0x60] sm:$0xff]
        %v510 = vld [vmem:[#allocation2 + $0x70] sm:$0xff]
        %v511 = vld [vmem:[%s2] sm:$0xff]
        %v512 = vld [vmem:[%s2 + $0x8] sm:$0xff]
        %v513 = vld [vmem:[%s2 + $0x10] sm:$0xff]
        %v514 = vld [vmem:[%s2 + $0x18] sm:$0xff]
        %v515 = vld [vmem:[#allocation2 + $0x1] sm:$0xff]
        %v516 = vld [vmem:[#allocation2 + $0x11] sm:$0xff]
        %v517 = vld [vmem:[#allocation2 + $0x21] sm:$0xff]
        %v518 = vld [vmem:[#allocation2 + $0x31] sm:$0xff]
        %v519 = vld [vmem:[#allocation2 + $0x41] sm:$0xff]
        %v520 = vld [vmem:[#allocation2 + $0x51] sm:$0xff]
        %v521 = vld [vmem:[#allocation2 + $0x61] sm:$0xff]
        %v522 = vld [vmem:[#allocation2 + $0x71] sm:$0xff]
        %s523 = scalar_lea.vmem %s2, 32
        %v524 = vld [vmem:[%s523] sm:$0xff]
        %v525 = vld [vmem:[%s523 + $0x8] sm:$0xff]
        %v526 = vld [vmem:[%s523 + $0x10] sm:$0xff]
        %v527 = vld [vmem:[%s523 + $0x18] sm:$0xff]
        %v529 = vsel %vm470, %v515, 0
        %v532 = vsel %vm470, %v516, 0
        %v535 = vsel %vm470, %v517, 0
        %v538 = vsel %vm470, %v518, 0
        %v541 = vsel %vm470, %v519, 0
        %v544 = vsel %vm470, %v520, 0
        %v547 = vsel %vm470, %v521, 0
        %v550 = vsel %vm470, %v522, 0
        %552 = vmatprep.subr.mxu0 0.0
        %553 = vmatpush1.msra.mxu0 0.0
        %554 = vmatprep.subr.mxu0 0.0
        %555 = vmatpush1.msra.mxu0 0.0
        %556 = vmatprep.subr.mxu0 0.0
        %557 = vmatpush1.msra.mxu0 0.0
        %558 = vmatprep.subr.mxu0 0.0
        %559 = vmatpush1.msra.mxu0 0.0
        %560 = vmatprep.subr.mxu0 0.0
        %561 = vmatpush1.msra.mxu0 0.0
        %562 = vmatprep.subr.mxu0 0.0
        %563 = vmatpush1.msra.mxu0 0.0
        %564 = vmatprep.subr.mxu0 0.0
        %565 = vmatpush1.msra.mxu0 0.0
        %566 = vmatprep.subr.mxu0 0.0
        %567 = vmatpush1.msra.mxu0 0.0
        %568 = vmatprep.subr.mxu0 0.0
        %569 = vmatpush1.msra.mxu0 0.0
        %570 = vmatprep.subr.mxu0 0.0
        %571 = vmatpush1.msra.mxu0 0.0
        %572 = vmatprep.subr.mxu0 0.0
        %573 = vmatpush1.msra.mxu0 0.0
        %574 = vmatprep.subr.mxu0 0.0
        %575 = vmatpush1.msra.mxu0 0.0
        %576 = vmatprep.subr.mxu0 0.0
        %577 = vmatpush1.msra.mxu0 %v527
        %578 = vmatprep.subr.mxu0 0.0
        %579 = vmatpush1.msra.mxu0 %v526
        %580 = vmatprep.subr.mxu0 0.0
        %581 = vmatpush1.msra.mxu0 %v525
        %582 = vmatprep.subr.mxu0 0.0
        %583 = vmatpush1.msra.mxu0 %v524
        %584 = vmatprep.subr.mxu0 0.0
        %585 = vmatpush2.msra.mxu0 0.0
        %586 = vmatprep.subr.mxu0 0.0
        %587 = vmatpush2.msra.mxu0 0.0
        %588 = vmatprep.subr.mxu0 0.0
        %589 = vmatpush2.msra.mxu0 0.0
        %590 = vmatprep.subr.mxu0 0.0
        %591 = vmatpush2.msra.mxu0 0.0
        %592 = vmatprep.subr.mxu0 0.0
        %593 = vmatpush2.msra.mxu0 0.0
        %594 = vmatprep.subr.mxu0 0.0
        %595 = vmatpush2.msra.mxu0 0.0
        %596 = vmatprep.subr.mxu0 0.0
        %597 = vmatpush2.msra.mxu0 0.0
        %598 = vmatprep.subr.mxu0 0.0
        %599 = vmatpush2.msra.mxu0 0.0
        %600 = vmatprep.subr.mxu0 0.0
        %601 = vmatpush2.msra.mxu0 0.0
        %602 = vmatprep.subr.mxu0 0.0
        %603 = vmatpush2.msra.mxu0 0.0
        %604 = vmatprep.subr.mxu0 0.0
        %605 = vmatpush2.msra.mxu0 0.0
        %606 = vmatprep.subr.mxu0 0.0
        %607 = vmatpush2.msra.mxu0 0.0
        %608 = vmatprep.subr.mxu0 0.0
        %609 = vmatpush2.msra.mxu0 0.0
        %610 = vmatprep.subr.mxu0 0.0
        %611 = vmatpush2.msra.mxu0 0.0
        %612 = vmatprep.subr.mxu0 0.0
        %613 = vmatpush2.msra.mxu0 0.0
        %614 = vmatprep.subr.mxu0 0.0
        %615 = vmatpush2.msra.mxu0 0.0
        %616 = vmatprep.mubr.f32.mxu0 0.0
        %617 = vmatmul.mubr.f32.gmra.mxu0 %v529
        %v618 = vpop.f32.mrf.mxu0
        %v619 = vadd.f32 0.0, %v618
        %v620 = vpop.f32.mrf.mxu0
        %621 = vmatprep.mubr.f32.mxu0 0.0
        %622 = vmatmul.mubr.f32.gmra.mxu0 %v532
        %v623 = vpop.f32.mrf.mxu0
        %v624 = vadd.f32 0.0, %v623
        %v625 = vpop.f32.mrf.mxu0
        %626 = vmatprep.mubr.f32.mxu0 0.0
        %627 = vmatmul.mubr.f32.gmra.mxu0 %v535
        %v628 = vpop.f32.mrf.mxu0
        %v629 = vadd.f32 0.0, %v628
        %v630 = vpop.f32.mrf.mxu0
        %631 = vmatprep.mubr.f32.mxu0 0.0
        %632 = vmatmul.mubr.f32.gmra.mxu0 %v538
        %v633 = vpop.f32.mrf.mxu0
        %v634 = vadd.f32 0.0, %v633
        %v635 = vpop.f32.mrf.mxu0
        %636 = vmatprep.mubr.f32.mxu0 0.0
        %637 = vmatmul.mubr.f32.gmra.mxu0 %v541
        %v638 = vpop.f32.mrf.mxu0
        %v639 = vadd.f32 0.0, %v638
        %v640 = vpop.f32.mrf.mxu0
        %641 = vmatprep.mubr.f32.mxu0 0.0
        %642 = vmatmul.mubr.f32.gmra.mxu0 %v544
        %v643 = vpop.f32.mrf.mxu0
        %v644 = vadd.f32 0.0, %v643
        %v645 = vpop.f32.mrf.mxu0
        %646 = vmatprep.mubr.f32.mxu0 0.0
        %647 = vmatmul.mubr.f32.gmra.mxu0 %v547
        %v648 = vpop.f32.mrf.mxu0
        %v649 = vadd.f32 0.0, %v648
        %v650 = vpop.f32.mrf.mxu0
        %651 = vmatprep.mubr.f32.mxu0 0.0
        %652 = vmatmul.mubr.f32.gmra.mxu0 %v550
        %v653 = vpop.f32.mrf.mxu0
        %v654 = vadd.f32 0.0, %v653
        %v655 = vpop.f32.mrf.mxu0
        %656 = vdwg.mxu0
        %v658 = vsel %vm470, %v503, 0
        %v661 = vsel %vm470, %v504, 0
        %v664 = vsel %vm470, %v505, 0
        %v667 = vsel %vm470, %v506, 0
        %v670 = vsel %vm470, %v507, 0
        %v673 = vsel %vm470, %v508, 0
        %v676 = vsel %vm470, %v509, 0
        %v679 = vsel %vm470, %v510, 0
        %681 = vmatprep.subr.mxu0 0.0
        %682 = vmatpush1.msra.mxu0 0.0
        %683 = vmatprep.subr.mxu0 0.0
        %684 = vmatpush1.msra.mxu0 0.0
        %685 = vmatprep.subr.mxu0 0.0
        %686 = vmatpush1.msra.mxu0 0.0
        %687 = vmatprep.subr.mxu0 0.0
        %688 = vmatpush1.msra.mxu0 0.0
        %689 = vmatprep.subr.mxu0 0.0
        %690 = vmatpush1.msra.mxu0 0.0
        %691 = vmatprep.subr.mxu0 0.0
        %692 = vmatpush1.msra.mxu0 0.0
        %693 = vmatprep.subr.mxu0 0.0
        %694 = vmatpush1.msra.mxu0 0.0
        %695 = vmatprep.subr.mxu0 0.0
        %696 = vmatpush1.msra.mxu0 0.0
        %697 = vmatprep.subr.mxu0 0.0
        %698 = vmatpush1.msra.mxu0 0.0
        %699 = vmatprep.subr.mxu0 0.0
        %700 = vmatpush1.msra.mxu0 0.0
        %701 = vmatprep.subr.mxu0 0.0
        %702 = vmatpush1.msra.mxu0 0.0
        %703 = vmatprep.subr.mxu0 0.0
        %704 = vmatpush1.msra.mxu0 0.0
        %705 = vmatprep.subr.mxu0 0.0
        %706 = vmatpush1.msra.mxu0 %v514
        %707 = vmatprep.subr.mxu0 0.0
        %708 = vmatpush1.msra.mxu0 %v513
        %709 = vmatprep.subr.mxu0 0.0
        %710 = vmatpush1.msra.mxu0 %v512
        %711 = vmatprep.subr.mxu0 0.0
        %712 = vmatpush1.msra.mxu0 %v511
        %713 = vmatprep.subr.mxu0 0.0
        %714 = vmatpush2.msra.mxu0 0.0
        %715 = vmatprep.subr.mxu0 0.0
        %716 = vmatpush2.msra.mxu0 0.0
        %717 = vmatprep.subr.mxu0 0.0
        %718 = vmatpush2.msra.mxu0 0.0
        %719 = vmatprep.subr.mxu0 0.0
        %720 = vmatpush2.msra.mxu0 0.0
        %721 = vmatprep.subr.mxu0 0.0
        %722 = vmatpush2.msra.mxu0 0.0
        %723 = vmatprep.subr.mxu0 0.0
        %724 = vmatpush2.msra.mxu0 0.0
        %725 = vmatprep.subr.mxu0 0.0
        %726 = vmatpush2.msra.mxu0 0.0
        %727 = vmatprep.subr.mxu0 0.0
        %728 = vmatpush2.msra.mxu0 0.0
        %729 = vmatprep.subr.mxu0 0.0
        %730 = vmatpush2.msra.mxu0 0.0
        %731 = vmatprep.subr.mxu0 0.0
        %732 = vmatpush2.msra.mxu0 0.0
        %733 = vmatprep.subr.mxu0 0.0
        %734 = vmatpush2.msra.mxu0 0.0
        %735 = vmatprep.subr.mxu0 0.0
        %736 = vmatpush2.msra.mxu0 0.0
        %737 = vmatprep.subr.mxu0 0.0
        %738 = vmatpush2.msra.mxu0 0.0
        %739 = vmatprep.subr.mxu0 0.0
        %740 = vmatpush2.msra.mxu0 0.0
        %741 = vmatprep.subr.mxu0 0.0
        %742 = vmatpush2.msra.mxu0 0.0
        %743 = vmatprep.subr.mxu0 0.0
        %744 = vmatpush2.msra.mxu0 0.0
        %745 = vmatprep.mubr.f32.mxu0 0.0
        %746 = vmatmul.mubr.f32.gmra.mxu0 %v658
        %v747 = vpop.f32.mrf.mxu0
        %v748 = vadd.f32 %v619, %v747
        %v749 = vpop.f32.mrf.mxu0
        %750 = vmatprep.mubr.f32.mxu0 0.0
        %751 = vmatmul.mubr.f32.gmra.mxu0 %v661
        %v752 = vpop.f32.mrf.mxu0
        %v753 = vadd.f32 %v624, %v752
        %v754 = vpop.f32.mrf.mxu0
        %755 = vmatprep.mubr.f32.mxu0 0.0
        %756 = vmatmul.mubr.f32.gmra.mxu0 %v664
        %v757 = vpop.f32.mrf.mxu0
        %v758 = vadd.f32 %v629, %v757
        %v759 = vpop.f32.mrf.mxu0
        %760 = vmatprep.mubr.f32.mxu0 0.0
        %761 = vmatmul.mubr.f32.gmra.mxu0 %v667
        %v762 = vpop.f32.mrf.mxu0
        %v763 = vadd.f32 %v634, %v762
        %v764 = vpop.f32.mrf.mxu0
        %765 = vmatprep.mubr.f32.mxu0 0.0
        %766 = vmatmul.mubr.f32.gmra.mxu0 %v670
        %v767 = vpop.f32.mrf.mxu0
        %v768 = vadd.f32 %v639, %v767
        %v769 = vpop.f32.mrf.mxu0
        %770 = vmatprep.mubr.f32.mxu0 0.0
        %771 = vmatmul.mubr.f32.gmra.mxu0 %v673
        %v772 = vpop.f32.mrf.mxu0
        %v773 = vadd.f32 %v644, %v772
        %v774 = vpop.f32.mrf.mxu0
        %775 = vmatprep.mubr.f32.mxu0 0.0
        %776 = vmatmul.mubr.f32.gmra.mxu0 %v676
        %v777 = vpop.f32.mrf.mxu0
        %v778 = vadd.f32 %v649, %v777
        %v779 = vpop.f32.mrf.mxu0
        %780 = vmatprep.mubr.f32.mxu0 0.0
        %781 = vmatmul.mubr.f32.gmra.mxu0 %v679
        %v782 = vpop.f32.mrf.mxu0
        %v783 = vadd.f32 %v654, %v782
        %v784 = vpop.f32.mrf.mxu0
        %785 = vdwg.mxu0
        %v786 = vld [vmem:[#allocation2 + $0x2] sm:$0xff]
        %v787 = vld [vmem:[#allocation2 + $0x12] sm:$0xff]
        %v788 = vld [vmem:[#allocation2 + $0x22] sm:$0xff]
        %v789 = vld [vmem:[#allocation2 + $0x32] sm:$0xff]
        %v790 = vld [vmem:[#allocation2 + $0x42] sm:$0xff]
        %v791 = vld [vmem:[#allocation2 + $0x52] sm:$0xff]
        %v792 = vld [vmem:[#allocation2 + $0x62] sm:$0xff]
        %v793 = vld [vmem:[#allocation2 + $0x72] sm:$0xff]
        %s794 = scalar_lea.vmem %s2, 64
        %v795 = vld [vmem:[%s794] sm:$0xff]
        %v796 = vld [vmem:[%s794 + $0x8] sm:$0xff]
        %v797 = vld [vmem:[%s794 + $0x10] sm:$0xff]
        %v798 = vld [vmem:[%s794 + $0x18] sm:$0xff]
        %v800 = vsel %vm470, %v786, 0
        %v803 = vsel %vm470, %v787, 0
        %v806 = vsel %vm470, %v788, 0
        %v809 = vsel %vm470, %v789, 0
        %v812 = vsel %vm470, %v790, 0
        %v815 = vsel %vm470, %v791, 0
        %v818 = vsel %vm470, %v792, 0
        %v821 = vsel %vm470, %v793, 0
        %823 = vmatprep.subr.mxu0 0.0
        %824 = vmatpush1.msra.mxu0 0.0
        %825 = vmatprep.subr.mxu0 0.0
        %826 = vmatpush1.msra.mxu0 0.0
        %827 = vmatprep.subr.mxu0 0.0
        %828 = vmatpush1.msra.mxu0 0.0
        %829 = vmatprep.subr.mxu0 0.0
        %830 = vmatpush1.msra.mxu0 0.0
        %831 = vmatprep.subr.mxu0 0.0
        %832 = vmatpush1.msra.mxu0 0.0
        %833 = vmatprep.subr.mxu0 0.0
        %834 = vmatpush1.msra.mxu0 0.0
        %835 = vmatprep.subr.mxu0 0.0
        %836 = vmatpush1.msra.mxu0 0.0
        %837 = vmatprep.subr.mxu0 0.0
        %838 = vmatpush1.msra.mxu0 0.0
        %839 = vmatprep.subr.mxu0 0.0
        %840 = vmatpush1.msra.mxu0 0.0
        %841 = vmatprep.subr.mxu0 0.0
        %842 = vmatpush1.msra.mxu0 0.0
        %843 = vmatprep.subr.mxu0 0.0
        %844 = vmatpush1.msra.mxu0 0.0
        %845 = vmatprep.subr.mxu0 0.0
        %846 = vmatpush1.msra.mxu0 0.0
        %847 = vmatprep.subr.mxu0 0.0
        %848 = vmatpush1.msra.mxu0 %v798
        %849 = vmatprep.subr.mxu0 0.0
        %850 = vmatpush1.msra.mxu0 %v797
        %851 = vmatprep.subr.mxu0 0.0
        %852 = vmatpush1.msra.mxu0 %v796
        %853 = vmatprep.subr.mxu0 0.0
        %854 = vmatpush1.msra.mxu0 %v795
        %855 = vmatprep.subr.mxu0 0.0
        %856 = vmatpush2.msra.mxu0 0.0
        %857 = vmatprep.subr.mxu0 0.0
        %858 = vmatpush2.msra.mxu0 0.0
        %859 = vmatprep.subr.mxu0 0.0
        %860 = vmatpush2.msra.mxu0 0.0
        %861 = vmatprep.subr.mxu0 0.0
        %862 = vmatpush2.msra.mxu0 0.0
        %863 = vmatprep.subr.mxu0 0.0
        %864 = vmatpush2.msra.mxu0 0.0
        %865 = vmatprep.subr.mxu0 0.0
        %866 = vmatpush2.msra.mxu0 0.0
        %867 = vmatprep.subr.mxu0 0.0
        %868 = vmatpush2.msra.mxu0 0.0
        %869 = vmatprep.subr.mxu0 0.0
        %870 = vmatpush2.msra.mxu0 0.0
        %871 = vmatprep.subr.mxu0 0.0
        %872 = vmatpush2.msra.mxu0 0.0
        %873 = vmatprep.subr.mxu0 0.0
        %874 = vmatpush2.msra.mxu0 0.0
        %875 = vmatprep.subr.mxu0 0.0
        %876 = vmatpush2.msra.mxu0 0.0
        %877 = vmatprep.subr.mxu0 0.0
        %878 = vmatpush2.msra.mxu0 0.0
        %879 = vmatprep.subr.mxu0 0.0
        %880 = vmatpush2.msra.mxu0 0.0
        %881 = vmatprep.subr.mxu0 0.0
        %882 = vmatpush2.msra.mxu0 0.0
        %883 = vmatprep.subr.mxu0 0.0
        %884 = vmatpush2.msra.mxu0 0.0
        %885 = vmatprep.subr.mxu0 0.0
        %886 = vmatpush2.msra.mxu0 0.0
        %887 = vmatprep.mubr.f32.mxu0 0.0
        %888 = vmatmul.mubr.f32.gmra.mxu0 %v800
        %v889 = vpop.f32.mrf.mxu0
        %v890 = vadd.f32 0.0, %v889
        %v891 = vpop.f32.mrf.mxu0
        %892 = vmatprep.mubr.f32.mxu0 0.0
        %893 = vmatmul.mubr.f32.gmra.mxu0 %v803
        %v894 = vpop.f32.mrf.mxu0
        %v895 = vadd.f32 0.0, %v894
        %v896 = vpop.f32.mrf.mxu0
        %897 = vmatprep.mubr.f32.mxu0 0.0
        %898 = vmatmul.mubr.f32.gmra.mxu0 %v806
        %v899 = vpop.f32.mrf.mxu0
        %v900 = vadd.f32 0.0, %v899
        %v901 = vpop.f32.mrf.mxu0
        %902 = vmatprep.mubr.f32.mxu0 0.0
        %903 = vmatmul.mubr.f32.gmra.mxu0 %v809
        %v904 = vpop.f32.mrf.mxu0
        %v905 = vadd.f32 0.0, %v904
        %v906 = vpop.f32.mrf.mxu0
        %907 = vmatprep.mubr.f32.mxu0 0.0
        %908 = vmatmul.mubr.f32.gmra.mxu0 %v812
        %v909 = vpop.f32.mrf.mxu0
        %v910 = vadd.f32 0.0, %v909
        %v911 = vpop.f32.mrf.mxu0
        %912 = vmatprep.mubr.f32.mxu0 0.0
        %913 = vmatmul.mubr.f32.gmra.mxu0 %v815
        %v914 = vpop.f32.mrf.mxu0
        %v915 = vadd.f32 0.0, %v914
        %v916 = vpop.f32.mrf.mxu0
        %917 = vmatprep.mubr.f32.mxu0 0.0
        %918 = vmatmul.mubr.f32.gmra.mxu0 %v818
        %v919 = vpop.f32.mrf.mxu0
        %v920 = vadd.f32 0.0, %v919
        %v921 = vpop.f32.mrf.mxu0
        %922 = vmatprep.mubr.f32.mxu0 0.0
        %923 = vmatmul.mubr.f32.gmra.mxu0 %v821
        %v924 = vpop.f32.mrf.mxu0
        %v925 = vadd.f32 0.0, %v924
        %v926 = vpop.f32.mrf.mxu0
        %927 = vdwg.mxu0
        %v928 = vadd.f32 %v748, %v890
        %v929 = vadd.f32 %v753, %v895
        %v930 = vadd.f32 %v758, %v900
        %v931 = vadd.f32 %v763, %v905
        %v932 = vadd.f32 %v768, %v910
        %v933 = vadd.f32 %v773, %v915
        %v934 = vadd.f32 %v778, %v920
        %v935 = vadd.f32 %v783, %v925
        %v936 = vld [vmem:[%s477] sm:$0xff]
        %v937 = vld [vmem:[%s477 + $0x10] sm:$0xff]
        %v938 = vld [vmem:[%s477 + $0x20] sm:$0xff]
        %v939 = vld [vmem:[%s477 + $0x30] sm:$0xff]
        %v940 = vld [vmem:[%s477 + $0x40] sm:$0xff]
        %v941 = vld [vmem:[%s477 + $0x50] sm:$0xff]
        %v942 = vld [vmem:[%s477 + $0x60] sm:$0xff]
        %v943 = vld [vmem:[%s477 + $0x70] sm:$0xff]
        %s944 = scalar_lea.vmem %s2, 96
        %v945 = vld [vmem:[%s944] sm:$0xff]
        %v946 = vld [vmem:[%s944 + $0x8] sm:$0xff]
        %v947 = vld [vmem:[%s944 + $0x10] sm:$0xff]
        %v948 = vld [vmem:[%s944 + $0x18] sm:$0xff]
        %v950 = vsel %vm470, %v936, 0
        %v953 = vsel %vm470, %v937, 0
        %v956 = vsel %vm470, %v938, 0
        %v959 = vsel %vm470, %v939, 0
        %v962 = vsel %vm470, %v940, 0
        %v965 = vsel %vm470, %v941, 0
        %v968 = vsel %vm470, %v942, 0
        %v971 = vsel %vm470, %v943, 0
        %973 = vmatprep.subr.mxu0 0.0
        %974 = vmatpush1.msra.mxu0 0.0
        %975 = vmatprep.subr.mxu0 0.0
        %976 = vmatpush1.msra.mxu0 0.0
        %977 = vmatprep.subr.mxu0 0.0
        %978 = vmatpush1.msra.mxu0 0.0
        %979 = vmatprep.subr.mxu0 0.0
        %980 = vmatpush1.msra.mxu0 0.0
        %981 = vmatprep.subr.mxu0 0.0
        %982 = vmatpush1.msra.mxu0 0.0
        %983 = vmatprep.subr.mxu0 0.0
        %984 = vmatpush1.msra.mxu0 0.0
        %985 = vmatprep.subr.mxu0 0.0
        %986 = vmatpush1.msra.mxu0 0.0
        %987 = vmatprep.subr.mxu0 0.0
        %988 = vmatpush1.msra.mxu0 0.0
        %989 = vmatprep.subr.mxu0 0.0
        %990 = vmatpush1.msra.mxu0 0.0
        %991 = vmatprep.subr.mxu0 0.0
        %992 = vmatpush1.msra.mxu0 0.0
        %993 = vmatprep.subr.mxu0 0.0
        %994 = vmatpush1.msra.mxu0 0.0
        %995 = vmatprep.subr.mxu0 0.0
        %996 = vmatpush1.msra.mxu0 0.0
        %997 = vmatprep.subr.mxu0 0.0
        %998 = vmatpush1.msra.mxu0 %v948
        %999 = vmatprep.subr.mxu0 0.0
        %1000 = vmatpush1.msra.mxu0 %v947
        %1001 = vmatprep.subr.mxu0 0.0
        %1002 = vmatpush1.msra.mxu0 %v946
        %1003 = vmatprep.subr.mxu0 0.0
        %1004 = vmatpush1.msra.mxu0 %v945
        %1005 = vmatprep.subr.mxu0 0.0
        %1006 = vmatpush2.msra.mxu0 0.0
        %1007 = vmatprep.subr.mxu0 0.0
        %1008 = vmatpush2.msra.mxu0 0.0
        %1009 = vmatprep.subr.mxu0 0.0
        %1010 = vmatpush2.msra.mxu0 0.0
        %1011 = vmatprep.subr.mxu0 0.0
        %1012 = vmatpush2.msra.mxu0 0.0
        %1013 = vmatprep.subr.mxu0 0.0
        %1014 = vmatpush2.msra.mxu0 0.0
        %1015 = vmatprep.subr.mxu0 0.0
        %1016 = vmatpush2.msra.mxu0 0.0
        %1017 = vmatprep.subr.mxu0 0.0
        %1018 = vmatpush2.msra.mxu0 0.0
        %1019 = vmatprep.subr.mxu0 0.0
        %1020 = vmatpush2.msra.mxu0 0.0
        %1021 = vmatprep.subr.mxu0 0.0
        %1022 = vmatpush2.msra.mxu0 0.0
        %1023 = vmatprep.subr.mxu0 0.0
        %1024 = vmatpush2.msra.mxu0 0.0
        %1025 = vmatprep.subr.mxu0 0.0
        %1026 = vmatpush2.msra.mxu0 0.0
        %1027 = vmatprep.subr.mxu0 0.0
        %1028 = vmatpush2.msra.mxu0 0.0
        %1029 = vmatprep.subr.mxu0 0.0
        %1030 = vmatpush2.msra.mxu0 0.0
        %1031 = vmatprep.subr.mxu0 0.0
        %1032 = vmatpush2.msra.mxu0 0.0
        %1033 = vmatprep.subr.mxu0 0.0
        %1034 = vmatpush2.msra.mxu0 0.0
        %1035 = vmatprep.subr.mxu0 0.0
        %1036 = vmatpush2.msra.mxu0 0.0
        %1037 = vmatprep.mubr.f32.mxu0 0.0
        %1038 = vmatmul.mubr.f32.gmra.mxu0 %v950
        %v1039 = vpop.f32.mrf.mxu0
        %v1040 = vadd.f32 0.0, %v1039
        %v1041 = vpop.f32.mrf.mxu0
        %1042 = vmatprep.mubr.f32.mxu0 0.0
        %1043 = vmatmul.mubr.f32.gmra.mxu0 %v953
        %v1044 = vpop.f32.mrf.mxu0
        %v1045 = vadd.f32 0.0, %v1044
        %v1046 = vpop.f32.mrf.mxu0
        %1047 = vmatprep.mubr.f32.mxu0 0.0
        %1048 = vmatmul.mubr.f32.gmra.mxu0 %v956
        %v1049 = vpop.f32.mrf.mxu0
        %v1050 = vadd.f32 0.0, %v1049
        %v1051 = vpop.f32.mrf.mxu0
        %1052 = vmatprep.mubr.f32.mxu0 0.0
        %1053 = vmatmul.mubr.f32.gmra.mxu0 %v959
        %v1054 = vpop.f32.mrf.mxu0
        %v1055 = vadd.f32 0.0, %v1054
        %v1056 = vpop.f32.mrf.mxu0
        %1057 = vmatprep.mubr.f32.mxu0 0.0
        %1058 = vmatmul.mubr.f32.gmra.mxu0 %v962
        %v1059 = vpop.f32.mrf.mxu0
        %v1060 = vadd.f32 0.0, %v1059
        %v1061 = vpop.f32.mrf.mxu0
        %1062 = vmatprep.mubr.f32.mxu0 0.0
        %1063 = vmatmul.mubr.f32.gmra.mxu0 %v965
        %v1064 = vpop.f32.mrf.mxu0
        %v1065 = vadd.f32 0.0, %v1064
        %v1066 = vpop.f32.mrf.mxu0
        %1067 = vmatprep.mubr.f32.mxu0 0.0
        %1068 = vmatmul.mubr.f32.gmra.mxu0 %v968
        %v1069 = vpop.f32.mrf.mxu0
        %v1070 = vadd.f32 0.0, %v1069
        %v1071 = vpop.f32.mrf.mxu0
        %1072 = vmatprep.mubr.f32.mxu0 0.0
        %1073 = vmatmul.mubr.f32.gmra.mxu0 %v971
        %v1074 = vpop.f32.mrf.mxu0
        %v1075 = vadd.f32 0.0, %v1074
        %v1076 = vpop.f32.mrf.mxu0
        %1077 = vdwg.mxu0
        %v1078 = vadd.f32 %v928, %v1040
        %v1079 = vadd.f32 %v929, %v1045
        %v1080 = vadd.f32 %v930, %v1050
        %v1081 = vadd.f32 %v931, %v1055
        %v1082 = vadd.f32 %v932, %v1060
        %v1083 = vadd.f32 %v933, %v1065
        %v1084 = vadd.f32 %v934, %v1070
        %v1085 = vadd.f32 %v935, %v1075
        %v1086 = vld [vmem:[%s477 + $0x1] sm:$0xff]
        %v1087 = vld [vmem:[%s477 + $0x11] sm:$0xff]
        %v1088 = vld [vmem:[%s477 + $0x21] sm:$0xff]
        %v1089 = vld [vmem:[%s477 + $0x31] sm:$0xff]
        %v1090 = vld [vmem:[%s477 + $0x41] sm:$0xff]
        %v1091 = vld [vmem:[%s477 + $0x51] sm:$0xff]
        %v1092 = vld [vmem:[%s477 + $0x61] sm:$0xff]
        %v1093 = vld [vmem:[%s477 + $0x71] sm:$0xff]
        %s1094 = scalar_lea.vmem %s2, 128
        %v1095 = vld [vmem:[%s1094] sm:$0xff]
        %v1096 = vld [vmem:[%s1094 + $0x8] sm:$0xff]
        %v1097 = vld [vmem:[%s1094 + $0x10] sm:$0xff]
        %v1098 = vld [vmem:[%s1094 + $0x18] sm:$0xff]
        %v1100 = vsel %vm470, %v1086, 0
        %v1103 = vsel %vm470, %v1087, 0
        %v1106 = vsel %vm470, %v1088, 0
        %v1109 = vsel %vm470, %v1089, 0
        %v1112 = vsel %vm470, %v1090, 0
        %v1115 = vsel %vm470, %v1091, 0
        %v1118 = vsel %vm470, %v1092, 0
        %v1121 = vsel %vm470, %v1093, 0
        %1123 = vmatprep.subr.mxu0 0.0
        %1124 = vmatpush1.msra.mxu0 0.0
        %1125 = vmatprep.subr.mxu0 0.0
        %1126 = vmatpush1.msra.mxu0 0.0
        %1127 = vmatprep.subr.mxu0 0.0
        %1128 = vmatpush1.msra.mxu0 0.0
        %1129 = vmatprep.subr.mxu0 0.0
        %1130 = vmatpush1.msra.mxu0 0.0
        %1131 = vmatprep.subr.mxu0 0.0
        %1132 = vmatpush1.msra.mxu0 0.0
        %1133 = vmatprep.subr.mxu0 0.0
        %1134 = vmatpush1.msra.mxu0 0.0
        %1135 = vmatprep.subr.mxu0 0.0
        %1136 = vmatpush1.msra.mxu0 0.0
        %1137 = vmatprep.subr.mxu0 0.0
        %1138 = vmatpush1.msra.mxu0 0.0
        %1139 = vmatprep.subr.mxu0 0.0
        %1140 = vmatpush1.msra.mxu0 0.0
        %1141 = vmatprep.subr.mxu0 0.0
        %1142 = vmatpush1.msra.mxu0 0.0
        %1143 = vmatprep.subr.mxu0 0.0
        %1144 = vmatpush1.msra.mxu0 0.0
        %1145 = vmatprep.subr.mxu0 0.0
        %1146 = vmatpush1.msra.mxu0 0.0
        %1147 = vmatprep.subr.mxu0 0.0
        %1148 = vmatpush1.msra.mxu0 %v1098
        %1149 = vmatprep.subr.mxu0 0.0
        %1150 = vmatpush1.msra.mxu0 %v1097
        %1151 = vmatprep.subr.mxu0 0.0
        %1152 = vmatpush1.msra.mxu0 %v1096
        %1153 = vmatprep.subr.mxu0 0.0
        %1154 = vmatpush1.msra.mxu0 %v1095
        %1155 = vmatprep.subr.mxu0 0.0
        %1156 = vmatpush2.msra.mxu0 0.0
        %1157 = vmatprep.subr.mxu0 0.0
        %1158 = vmatpush2.msra.mxu0 0.0
        %1159 = vmatprep.subr.mxu0 0.0
        %1160 = vmatpush2.msra.mxu0 0.0
        %1161 = vmatprep.subr.mxu0 0.0
        %1162 = vmatpush2.msra.mxu0 0.0
        %1163 = vmatprep.subr.mxu0 0.0
        %1164 = vmatpush2.msra.mxu0 0.0
        %1165 = vmatprep.subr.mxu0 0.0
        %1166 = vmatpush2.msra.mxu0 0.0
        %1167 = vmatprep.subr.mxu0 0.0
        %1168 = vmatpush2.msra.mxu0 0.0
        %1169 = vmatprep.subr.mxu0 0.0
        %1170 = vmatpush2.msra.mxu0 0.0
        %1171 = vmatprep.subr.mxu0 0.0
        %1172 = vmatpush2.msra.mxu0 0.0
        %1173 = vmatprep.subr.mxu0 0.0
        %1174 = vmatpush2.msra.mxu0 0.0
        %1175 = vmatprep.subr.mxu0 0.0
        %1176 = vmatpush2.msra.mxu0 0.0
        %1177 = vmatprep.subr.mxu0 0.0
        %1178 = vmatpush2.msra.mxu0 0.0
        %1179 = vmatprep.subr.mxu0 0.0
        %1180 = vmatpush2.msra.mxu0 0.0
        %1181 = vmatprep.subr.mxu0 0.0
        %1182 = vmatpush2.msra.mxu0 0.0
        %1183 = vmatprep.subr.mxu0 0.0
        %1184 = vmatpush2.msra.mxu0 0.0
        %1185 = vmatprep.subr.mxu0 0.0
        %1186 = vmatpush2.msra.mxu0 0.0
        %1187 = vmatprep.mubr.f32.mxu0 0.0
        %1188 = vmatmul.mubr.f32.gmra.mxu0 %v1100
        %v1189 = vpop.f32.mrf.mxu0
        %v1190 = vadd.f32 0.0, %v1189
        %v1191 = vpop.f32.mrf.mxu0
        %1192 = vmatprep.mubr.f32.mxu0 0.0
        %1193 = vmatmul.mubr.f32.gmra.mxu0 %v1103
        %v1194 = vpop.f32.mrf.mxu0
        %v1195 = vadd.f32 0.0, %v1194
        %v1196 = vpop.f32.mrf.mxu0
        %1197 = vmatprep.mubr.f32.mxu0 0.0
        %1198 = vmatmul.mubr.f32.gmra.mxu0 %v1106
        %v1199 = vpop.f32.mrf.mxu0
        %v1200 = vadd.f32 0.0, %v1199
        %v1201 = vpop.f32.mrf.mxu0
        %1202 = vmatprep.mubr.f32.mxu0 0.0
        %1203 = vmatmul.mubr.f32.gmra.mxu0 %v1109
        %v1204 = vpop.f32.mrf.mxu0
        %v1205 = vadd.f32 0.0, %v1204
        %v1206 = vpop.f32.mrf.mxu0
        %1207 = vmatprep.mubr.f32.mxu0 0.0
        %1208 = vmatmul.mubr.f32.gmra.mxu0 %v1112
        %v1209 = vpop.f32.mrf.mxu0
        %v1210 = vadd.f32 0.0, %v1209
        %v1211 = vpop.f32.mrf.mxu0
        %1212 = vmatprep.mubr.f32.mxu0 0.0
        %1213 = vmatmul.mubr.f32.gmra.mxu0 %v1115
        %v1214 = vpop.f32.mrf.mxu0
        %v1215 = vadd.f32 0.0, %v1214
        %v1216 = vpop.f32.mrf.mxu0
        %1217 = vmatprep.mubr.f32.mxu0 0.0
        %1218 = vmatmul.mubr.f32.gmra.mxu0 %v1118
        %v1219 = vpop.f32.mrf.mxu0
        %v1220 = vadd.f32 0.0, %v1219
        %v1221 = vpop.f32.mrf.mxu0
        %1222 = vmatprep.mubr.f32.mxu0 0.0
        %1223 = vmatmul.mubr.f32.gmra.mxu0 %v1121
        %v1224 = vpop.f32.mrf.mxu0
        %v1225 = vadd.f32 0.0, %v1224
        %v1226 = vpop.f32.mrf.mxu0
        %1227 = vdwg.mxu0
        %v1228 = vadd.f32 %v1078, %v1190
        %v1229 = vadd.f32 %v1079, %v1195
        %v1230 = vadd.f32 %v1080, %v1200
        %v1231 = vadd.f32 %v1081, %v1205
        %v1232 = vadd.f32 %v1082, %v1210
        %v1233 = vadd.f32 %v1083, %v1215
        %v1234 = vadd.f32 %v1084, %v1220
        %v1235 = vadd.f32 %v1085, %v1225
        %v1236 = vld [vmem:[%s477 + $0x2] sm:$0xff]
        %v1237 = vld [vmem:[%s477 + $0x12] sm:$0xff]
        %v1238 = vld [vmem:[%s477 + $0x22] sm:$0xff]
        %v1239 = vld [vmem:[%s477 + $0x32] sm:$0xff]
        %v1240 = vld [vmem:[%s477 + $0x42] sm:$0xff]
        %v1241 = vld [vmem:[%s477 + $0x52] sm:$0xff]
        %v1242 = vld [vmem:[%s477 + $0x62] sm:$0xff]
        %v1243 = vld [vmem:[%s477 + $0x72] sm:$0xff]
        %s1244 = scalar_lea.vmem %s2, 160
        %v1245 = vld [vmem:[%s1244] sm:$0xff]
        %v1246 = vld [vmem:[%s1244 + $0x8] sm:$0xff]
        %v1247 = vld [vmem:[%s1244 + $0x10] sm:$0xff]
        %v1248 = vld [vmem:[%s1244 + $0x18] sm:$0xff]
        %v1250 = vsel %vm470, %v1236, 0
        %v1253 = vsel %vm470, %v1237, 0
        %v1256 = vsel %vm470, %v1238, 0
        %v1259 = vsel %vm470, %v1239, 0
        %v1262 = vsel %vm470, %v1240, 0
        %v1265 = vsel %vm470, %v1241, 0
        %v1268 = vsel %vm470, %v1242, 0
        %v1271 = vsel %vm470, %v1243, 0
        %1273 = vmatprep.subr.mxu0 0.0
        %1274 = vmatpush1.msra.mxu0 0.0
        %1275 = vmatprep.subr.mxu0 0.0
        %1276 = vmatpush1.msra.mxu0 0.0
        %1277 = vmatprep.subr.mxu0 0.0
        %1278 = vmatpush1.msra.mxu0 0.0
        %1279 = vmatprep.subr.mxu0 0.0
        %1280 = vmatpush1.msra.mxu0 0.0
        %1281 = vmatprep.subr.mxu0 0.0
        %1282 = vmatpush1.msra.mxu0 0.0
        %1283 = vmatprep.subr.mxu0 0.0
        %1284 = vmatpush1.msra.mxu0 0.0
        %1285 = vmatprep.subr.mxu0 0.0
        %1286 = vmatpush1.msra.mxu0 0.0
        %1287 = vmatprep.subr.mxu0 0.0
        %1288 = vmatpush1.msra.mxu0 0.0
        %1289 = vmatprep.subr.mxu0 0.0
        %1290 = vmatpush1.msra.mxu0 0.0
        %1291 = vmatprep.subr.mxu0 0.0
        %1292 = vmatpush1.msra.mxu0 0.0
        %1293 = vmatprep.subr.mxu0 0.0
        %1294 = vmatpush1.msra.mxu0 0.0
        %1295 = vmatprep.subr.mxu0 0.0
        %1296 = vmatpush1.msra.mxu0 0.0
        %1297 = vmatprep.subr.mxu0 0.0
        %1298 = vmatpush1.msra.mxu0 %v1248
        %1299 = vmatprep.subr.mxu0 0.0
        %1300 = vmatpush1.msra.mxu0 %v1247
        %1301 = vmatprep.subr.mxu0 0.0
        %1302 = vmatpush1.msra.mxu0 %v1246
        %1303 = vmatprep.subr.mxu0 0.0
        %1304 = vmatpush1.msra.mxu0 %v1245
        %1305 = vmatprep.subr.mxu0 0.0
        %1306 = vmatpush2.msra.mxu0 0.0
        %1307 = vmatprep.subr.mxu0 0.0
        %1308 = vmatpush2.msra.mxu0 0.0
        %1309 = vmatprep.subr.mxu0 0.0
        %1310 = vmatpush2.msra.mxu0 0.0
        %1311 = vmatprep.subr.mxu0 0.0
        %1312 = vmatpush2.msra.mxu0 0.0
        %1313 = vmatprep.subr.mxu0 0.0
        %1314 = vmatpush2.msra.mxu0 0.0
        %1315 = vmatprep.subr.mxu0 0.0
        %1316 = vmatpush2.msra.mxu0 0.0
        %1317 = vmatprep.subr.mxu0 0.0
        %1318 = vmatpush2.msra.mxu0 0.0
        %1319 = vmatprep.subr.mxu0 0.0
        %1320 = vmatpush2.msra.mxu0 0.0
        %1321 = vmatprep.subr.mxu0 0.0
        %1322 = vmatpush2.msra.mxu0 0.0
        %1323 = vmatprep.subr.mxu0 0.0
        %1324 = vmatpush2.msra.mxu0 0.0
        %1325 = vmatprep.subr.mxu0 0.0
        %1326 = vmatpush2.msra.mxu0 0.0
        %1327 = vmatprep.subr.mxu0 0.0
        %1328 = vmatpush2.msra.mxu0 0.0
        %1329 = vmatprep.subr.mxu0 0.0
        %1330 = vmatpush2.msra.mxu0 0.0
        %1331 = vmatprep.subr.mxu0 0.0
        %1332 = vmatpush2.msra.mxu0 0.0
        %1333 = vmatprep.subr.mxu0 0.0
        %1334 = vmatpush2.msra.mxu0 0.0
        %1335 = vmatprep.subr.mxu0 0.0
        %1336 = vmatpush2.msra.mxu0 0.0
        %1337 = vmatprep.mubr.f32.mxu0 0.0
        %1338 = vmatmul.mubr.f32.gmra.mxu0 %v1250
        %v1339 = vpop.f32.mrf.mxu0
        %v1340 = vadd.f32 0.0, %v1339
        %v1341 = vpop.f32.mrf.mxu0
        %1342 = vmatprep.mubr.f32.mxu0 0.0
        %1343 = vmatmul.mubr.f32.gmra.mxu0 %v1253
        %v1344 = vpop.f32.mrf.mxu0
        %v1345 = vadd.f32 0.0, %v1344
        %v1346 = vpop.f32.mrf.mxu0
        %1347 = vmatprep.mubr.f32.mxu0 0.0
        %1348 = vmatmul.mubr.f32.gmra.mxu0 %v1256
        %v1349 = vpop.f32.mrf.mxu0
        %v1350 = vadd.f32 0.0, %v1349
        %v1351 = vpop.f32.mrf.mxu0
        %1352 = vmatprep.mubr.f32.mxu0 0.0
        %1353 = vmatmul.mubr.f32.gmra.mxu0 %v1259
        %v1354 = vpop.f32.mrf.mxu0
        %v1355 = vadd.f32 0.0, %v1354
        %v1356 = vpop.f32.mrf.mxu0
        %1357 = vmatprep.mubr.f32.mxu0 0.0
        %1358 = vmatmul.mubr.f32.gmra.mxu0 %v1262
        %v1359 = vpop.f32.mrf.mxu0
        %v1360 = vadd.f32 0.0, %v1359
        %v1361 = vpop.f32.mrf.mxu0
        %1362 = vmatprep.mubr.f32.mxu0 0.0
        %1363 = vmatmul.mubr.f32.gmra.mxu0 %v1265
        %v1364 = vpop.f32.mrf.mxu0
        %v1365 = vadd.f32 0.0, %v1364
        %v1366 = vpop.f32.mrf.mxu0
        %1367 = vmatprep.mubr.f32.mxu0 0.0
        %1368 = vmatmul.mubr.f32.gmra.mxu0 %v1268
        %v1369 = vpop.f32.mrf.mxu0
        %v1370 = vadd.f32 0.0, %v1369
        %v1371 = vpop.f32.mrf.mxu0
        %1372 = vmatprep.mubr.f32.mxu0 0.0
        %1373 = vmatmul.mubr.f32.gmra.mxu0 %v1271
        %v1374 = vpop.f32.mrf.mxu0
        %v1375 = vadd.f32 0.0, %v1374
        %v1376 = vpop.f32.mrf.mxu0
        %1377 = vdwg.mxu0
        %v1378 = vadd.f32 %v1228, %v1340
        %v1379 = vadd.f32 %v1229, %v1345
        %v1380 = vadd.f32 %v1230, %v1350
        %v1381 = vadd.f32 %v1231, %v1355
        %v1382 = vadd.f32 %v1232, %v1360
        %v1383 = vadd.f32 %v1233, %v1365
        %v1384 = vadd.f32 %v1234, %v1370
        %v1385 = vadd.f32 %v1235, %v1375
        %s1386 = scalar_lea.vmem [#allocation2], 32
        %v1387 = vld [vmem:[%s1386] sm:$0xff]
        %v1388 = vld [vmem:[%s1386 + $0x10] sm:$0xff]
        %v1389 = vld [vmem:[%s1386 + $0x20] sm:$0xff]
        %v1390 = vld [vmem:[%s1386 + $0x30] sm:$0xff]
        %v1391 = vld [vmem:[%s1386 + $0x40] sm:$0xff]
        %v1392 = vld [vmem:[%s1386 + $0x50] sm:$0xff]
        %v1393 = vld [vmem:[%s1386 + $0x60] sm:$0xff]
        %v1394 = vld [vmem:[%s1386 + $0x70] sm:$0xff]
        %s1395 = scalar_lea.vmem %s2, 192
        %v1396 = vld [vmem:[%s1395] sm:$0xff]
        %v1397 = vld [vmem:[%s1395 + $0x8] sm:$0xff]
        %v1398 = vld [vmem:[%s1395 + $0x10] sm:$0xff]
        %v1399 = vld [vmem:[%s1395 + $0x18] sm:$0xff]
        %v1401 = vsel %vm470, %v1387, 0
        %v1404 = vsel %vm470, %v1388, 0
        %v1407 = vsel %vm470, %v1389, 0
        %v1410 = vsel %vm470, %v1390, 0
        %v1413 = vsel %vm470, %v1391, 0
        %v1416 = vsel %vm470, %v1392, 0
        %v1419 = vsel %vm470, %v1393, 0
        %v1422 = vsel %vm470, %v1394, 0
        %1424 = vmatprep.subr.mxu0 0.0
        %1425 = vmatpush1.msra.mxu0 0.0
        %1426 = vmatprep.subr.mxu0 0.0
        %1427 = vmatpush1.msra.mxu0 0.0
        %1428 = vmatprep.subr.mxu0 0.0
        %1429 = vmatpush1.msra.mxu0 0.0
        %1430 = vmatprep.subr.mxu0 0.0
        %1431 = vmatpush1.msra.mxu0 0.0
        %1432 = vmatprep.subr.mxu0 0.0
        %1433 = vmatpush1.msra.mxu0 0.0
        %1434 = vmatprep.subr.mxu0 0.0
        %1435 = vmatpush1.msra.mxu0 0.0
        %1436 = vmatprep.subr.mxu0 0.0
        %1437 = vmatpush1.msra.mxu0 0.0
        %1438 = vmatprep.subr.mxu0 0.0
        %1439 = vmatpush1.msra.mxu0 0.0
        %1440 = vmatprep.subr.mxu0 0.0
        %1441 = vmatpush1.msra.mxu0 0.0
        %1442 = vmatprep.subr.mxu0 0.0
        %1443 = vmatpush1.msra.mxu0 0.0
        %1444 = vmatprep.subr.mxu0 0.0
        %1445 = vmatpush1.msra.mxu0 0.0
        %1446 = vmatprep.subr.mxu0 0.0
        %1447 = vmatpush1.msra.mxu0 0.0
        %1448 = vmatprep.subr.mxu0 0.0
        %1449 = vmatpush1.msra.mxu0 %v1399
        %1450 = vmatprep.subr.mxu0 0.0
        %1451 = vmatpush1.msra.mxu0 %v1398
        %1452 = vmatprep.subr.mxu0 0.0
        %1453 = vmatpush1.msra.mxu0 %v1397
        %1454 = vmatprep.subr.mxu0 0.0
        %1455 = vmatpush1.msra.mxu0 %v1396
        %1456 = vmatprep.subr.mxu0 0.0
        %1457 = vmatpush2.msra.mxu0 0.0
        %1458 = vmatprep.subr.mxu0 0.0
        %1459 = vmatpush2.msra.mxu0 0.0
        %1460 = vmatprep.subr.mxu0 0.0
        %1461 = vmatpush2.msra.mxu0 0.0
        %1462 = vmatprep.subr.mxu0 0.0
        %1463 = vmatpush2.msra.mxu0 0.0
        %1464 = vmatprep.subr.mxu0 0.0
        %1465 = vmatpush2.msra.mxu0 0.0
        %1466 = vmatprep.subr.mxu0 0.0
        %1467 = vmatpush2.msra.mxu0 0.0
        %1468 = vmatprep.subr.mxu0 0.0
        %1469 = vmatpush2.msra.mxu0 0.0
        %1470 = vmatprep.subr.mxu0 0.0
        %1471 = vmatpush2.msra.mxu0 0.0
        %1472 = vmatprep.subr.mxu0 0.0
        %1473 = vmatpush2.msra.mxu0 0.0
        %1474 = vmatprep.subr.mxu0 0.0
        %1475 = vmatpush2.msra.mxu0 0.0
        %1476 = vmatprep.subr.mxu0 0.0
        %1477 = vmatpush2.msra.mxu0 0.0
        %1478 = vmatprep.subr.mxu0 0.0
        %1479 = vmatpush2.msra.mxu0 0.0
        %1480 = vmatprep.subr.mxu0 0.0
        %1481 = vmatpush2.msra.mxu0 0.0
        %1482 = vmatprep.subr.mxu0 0.0
        %1483 = vmatpush2.msra.mxu0 0.0
        %1484 = vmatprep.subr.mxu0 0.0
        %1485 = vmatpush2.msra.mxu0 0.0
        %1486 = vmatprep.subr.mxu0 0.0
        %1487 = vmatpush2.msra.mxu0 0.0
        %1488 = vmatprep.mubr.f32.mxu0 0.0
        %1489 = vmatmul.mubr.f32.gmra.mxu0 %v1401
        %v1490 = vpop.f32.mrf.mxu0
        %v1491 = vadd.f32 0.0, %v1490
        %v1492 = vpop.f32.mrf.mxu0
        %1493 = vmatprep.mubr.f32.mxu0 0.0
        %1494 = vmatmul.mubr.f32.gmra.mxu0 %v1404
        %v1495 = vpop.f32.mrf.mxu0
        %v1496 = vadd.f32 0.0, %v1495
        %v1497 = vpop.f32.mrf.mxu0
        %1498 = vmatprep.mubr.f32.mxu0 0.0
        %1499 = vmatmul.mubr.f32.gmra.mxu0 %v1407
        %v1500 = vpop.f32.mrf.mxu0
        %v1501 = vadd.f32 0.0, %v1500
        %v1502 = vpop.f32.mrf.mxu0
        %1503 = vmatprep.mubr.f32.mxu0 0.0
        %1504 = vmatmul.mubr.f32.gmra.mxu0 %v1410
        %v1505 = vpop.f32.mrf.mxu0
        %v1506 = vadd.f32 0.0, %v1505
        %v1507 = vpop.f32.mrf.mxu0
        %1508 = vmatprep.mubr.f32.mxu0 0.0
        %1509 = vmatmul.mubr.f32.gmra.mxu0 %v1413
        %v1510 = vpop.f32.mrf.mxu0
        %v1511 = vadd.f32 0.0, %v1510
        %v1512 = vpop.f32.mrf.mxu0
        %1513 = vmatprep.mubr.f32.mxu0 0.0
        %1514 = vmatmul.mubr.f32.gmra.mxu0 %v1416
        %v1515 = vpop.f32.mrf.mxu0
        %v1516 = vadd.f32 0.0, %v1515
        %v1517 = vpop.f32.mrf.mxu0
        %1518 = vmatprep.mubr.f32.mxu0 0.0
        %1519 = vmatmul.mubr.f32.gmra.mxu0 %v1419
        %v1520 = vpop.f32.mrf.mxu0
        %v1521 = vadd.f32 0.0, %v1520
        %v1522 = vpop.f32.mrf.mxu0
        %1523 = vmatprep.mubr.f32.mxu0 0.0
        %1524 = vmatmul.mubr.f32.gmra.mxu0 %v1422
        %v1525 = vpop.f32.mrf.mxu0
        %v1526 = vadd.f32 0.0, %v1525
        %v1527 = vpop.f32.mrf.mxu0
        %1528 = vdwg.mxu0
        %v1529 = vadd.f32 %v1378, %v1491
        %v1530 = vadd.f32 %v1379, %v1496
        %v1531 = vadd.f32 %v1380, %v1501
        %v1532 = vadd.f32 %v1381, %v1506
        %v1533 = vadd.f32 %v1382, %v1511
        %v1534 = vadd.f32 %v1383, %v1516
        %v1535 = vadd.f32 %v1384, %v1521
        %v1536 = vadd.f32 %v1385, %v1526
        %v1537 = vld [vmem:[%s1386 + $0x1] sm:$0xff]
        %v1538 = vld [vmem:[%s1386 + $0x11] sm:$0xff]
        %v1539 = vld [vmem:[%s1386 + $0x21] sm:$0xff]
        %v1540 = vld [vmem:[%s1386 + $0x31] sm:$0xff]
        %v1541 = vld [vmem:[%s1386 + $0x41] sm:$0xff]
        %v1542 = vld [vmem:[%s1386 + $0x51] sm:$0xff]
        %v1543 = vld [vmem:[%s1386 + $0x61] sm:$0xff]
        %v1544 = vld [vmem:[%s1386 + $0x71] sm:$0xff]
        %s1545 = scalar_lea.vmem %s2, 224
        %v1546 = vld [vmem:[%s1545] sm:$0xff]
        %v1547 = vld [vmem:[%s1545 + $0x8] sm:$0xff]
        %v1548 = vld [vmem:[%s1545 + $0x10] sm:$0xff]
        %v1549 = vld [vmem:[%s1545 + $0x18] sm:$0xff]
        %v1551 = vsel %vm470, %v1537, 0
        %v1554 = vsel %vm470, %v1538, 0
        %v1557 = vsel %vm470, %v1539, 0
        %v1560 = vsel %vm470, %v1540, 0
        %v1563 = vsel %vm470, %v1541, 0
        %v1566 = vsel %vm470, %v1542, 0
        %v1569 = vsel %vm470, %v1543, 0
        %v1572 = vsel %vm470, %v1544, 0
        %1574 = vmatprep.subr.mxu0 0.0
        %1575 = vmatpush1.msra.mxu0 0.0
        %1576 = vmatprep.subr.mxu0 0.0
        %1577 = vmatpush1.msra.mxu0 0.0
        %1578 = vmatprep.subr.mxu0 0.0
        %1579 = vmatpush1.msra.mxu0 0.0
        %1580 = vmatprep.subr.mxu0 0.0
        %1581 = vmatpush1.msra.mxu0 0.0
        %1582 = vmatprep.subr.mxu0 0.0
        %1583 = vmatpush1.msra.mxu0 0.0
        %1584 = vmatprep.subr.mxu0 0.0
        %1585 = vmatpush1.msra.mxu0 0.0
        %1586 = vmatprep.subr.mxu0 0.0
        %1587 = vmatpush1.msra.mxu0 0.0
        %1588 = vmatprep.subr.mxu0 0.0
        %1589 = vmatpush1.msra.mxu0 0.0
        %1590 = vmatprep.subr.mxu0 0.0
        %1591 = vmatpush1.msra.mxu0 0.0
        %1592 = vmatprep.subr.mxu0 0.0
        %1593 = vmatpush1.msra.mxu0 0.0
        %1594 = vmatprep.subr.mxu0 0.0
        %1595 = vmatpush1.msra.mxu0 0.0
        %1596 = vmatprep.subr.mxu0 0.0
        %1597 = vmatpush1.msra.mxu0 0.0
        %1598 = vmatprep.subr.mxu0 0.0
        %1599 = vmatpush1.msra.mxu0 %v1549
        %1600 = vmatprep.subr.mxu0 0.0
        %1601 = vmatpush1.msra.mxu0 %v1548
        %1602 = vmatprep.subr.mxu0 0.0
        %1603 = vmatpush1.msra.mxu0 %v1547
        %1604 = vmatprep.subr.mxu0 0.0
        %1605 = vmatpush1.msra.mxu0 %v1546
        %1606 = vmatprep.subr.mxu0 0.0
        %1607 = vmatpush2.msra.mxu0 0.0
        %1608 = vmatprep.subr.mxu0 0.0
        %1609 = vmatpush2.msra.mxu0 0.0
        %1610 = vmatprep.subr.mxu0 0.0
        %1611 = vmatpush2.msra.mxu0 0.0
        %1612 = vmatprep.subr.mxu0 0.0
        %1613 = vmatpush2.msra.mxu0 0.0
        %1614 = vmatprep.subr.mxu0 0.0
        %1615 = vmatpush2.msra.mxu0 0.0
        %1616 = vmatprep.subr.mxu0 0.0
        %1617 = vmatpush2.msra.mxu0 0.0
        %1618 = vmatprep.subr.mxu0 0.0
        %1619 = vmatpush2.msra.mxu0 0.0
        %1620 = vmatprep.subr.mxu0 0.0
        %1621 = vmatpush2.msra.mxu0 0.0
        %1622 = vmatprep.subr.mxu0 0.0
        %1623 = vmatpush2.msra.mxu0 0.0
        %1624 = vmatprep.subr.mxu0 0.0
        %1625 = vmatpush2.msra.mxu0 0.0
        %1626 = vmatprep.subr.mxu0 0.0
        %1627 = vmatpush2.msra.mxu0 0.0
        %1628 = vmatprep.subr.mxu0 0.0
        %1629 = vmatpush2.msra.mxu0 0.0
        %1630 = vmatprep.subr.mxu0 0.0
        %1631 = vmatpush2.msra.mxu0 0.0
        %1632 = vmatprep.subr.mxu0 0.0
        %1633 = vmatpush2.msra.mxu0 0.0
        %1634 = vmatprep.subr.mxu0 0.0
        %1635 = vmatpush2.msra.mxu0 0.0
        %1636 = vmatprep.subr.mxu0 0.0
        %1637 = vmatpush2.msra.mxu0 0.0
        %1638 = vmatprep.mubr.f32.mxu0 0.0
        %1639 = vmatmul.mubr.f32.gmra.mxu0 %v1551
        %v1640 = vpop.f32.mrf.mxu0
        %v1641 = vadd.f32 0.0, %v1640
        %v1642 = vpop.f32.mrf.mxu0
        %1643 = vmatprep.mubr.f32.mxu0 0.0
        %1644 = vmatmul.mubr.f32.gmra.mxu0 %v1554
        %v1645 = vpop.f32.mrf.mxu0
        %v1646 = vadd.f32 0.0, %v1645
        %v1647 = vpop.f32.mrf.mxu0
        %1648 = vmatprep.mubr.f32.mxu0 0.0
        %1649 = vmatmul.mubr.f32.gmra.mxu0 %v1557
        %v1650 = vpop.f32.mrf.mxu0
        %v1651 = vadd.f32 0.0, %v1650
        %v1652 = vpop.f32.mrf.mxu0
        %1653 = vmatprep.mubr.f32.mxu0 0.0
        %1654 = vmatmul.mubr.f32.gmra.mxu0 %v1560
        %v1655 = vpop.f32.mrf.mxu0
        %v1656 = vadd.f32 0.0, %v1655
        %v1657 = vpop.f32.mrf.mxu0
        %1658 = vmatprep.mubr.f32.mxu0 0.0
        %1659 = vmatmul.mubr.f32.gmra.mxu0 %v1563
        %v1660 = vpop.f32.mrf.mxu0
        %v1661 = vadd.f32 0.0, %v1660
        %v1662 = vpop.f32.mrf.mxu0
        %1663 = vmatprep.mubr.f32.mxu0 0.0
        %1664 = vmatmul.mubr.f32.gmra.mxu0 %v1566
        %v1665 = vpop.f32.mrf.mxu0
        %v1666 = vadd.f32 0.0, %v1665
        %v1667 = vpop.f32.mrf.mxu0
        %1668 = vmatprep.mubr.f32.mxu0 0.0
        %1669 = vmatmul.mubr.f32.gmra.mxu0 %v1569
        %v1670 = vpop.f32.mrf.mxu0
        %v1671 = vadd.f32 0.0, %v1670
        %v1672 = vpop.f32.mrf.mxu0
        %1673 = vmatprep.mubr.f32.mxu0 0.0
        %1674 = vmatmul.mubr.f32.gmra.mxu0 %v1572
        %v1675 = vpop.f32.mrf.mxu0
        %v1676 = vadd.f32 0.0, %v1675
        %v1677 = vpop.f32.mrf.mxu0
        %1678 = vdwg.mxu0
        %v1679 = vadd.f32 %v1529, %v1641
        %v1680 = vadd.f32 %v1530, %v1646
        %v1681 = vadd.f32 %v1531, %v1651
        %v1682 = vadd.f32 %v1532, %v1656
        %v1683 = vadd.f32 %v1533, %v1661
        %v1684 = vadd.f32 %v1534, %v1666
        %v1685 = vadd.f32 %v1535, %v1671
        %v1686 = vadd.f32 %v1536, %v1676
        %v1687 = vld [vmem:[%s1386 + $0x2] sm:$0xff]
        %v1688 = vld [vmem:[%s1386 + $0x12] sm:$0xff]
        %v1689 = vld [vmem:[%s1386 + $0x22] sm:$0xff]
        %v1690 = vld [vmem:[%s1386 + $0x32] sm:$0xff]
        %v1691 = vld [vmem:[%s1386 + $0x42] sm:$0xff]
        %v1692 = vld [vmem:[%s1386 + $0x52] sm:$0xff]
        %v1693 = vld [vmem:[%s1386 + $0x62] sm:$0xff]
        %v1694 = vld [vmem:[%s1386 + $0x72] sm:$0xff]
        %s1695 = scalar_lea.vmem %s2, 256
        %v1696 = vld [vmem:[%s1695] sm:$0xff]
        %v1697 = vld [vmem:[%s1695 + $0x8] sm:$0xff]
        %v1698 = vld [vmem:[%s1695 + $0x10] sm:$0xff]
        %v1699 = vld [vmem:[%s1695 + $0x18] sm:$0xff]
        %v1701 = vsel %vm470, %v1687, 0
        %v1704 = vsel %vm470, %v1688, 0
        %v1707 = vsel %vm470, %v1689, 0
        %v1710 = vsel %vm470, %v1690, 0
        %v1713 = vsel %vm470, %v1691, 0
        %v1716 = vsel %vm470, %v1692, 0
        %v1719 = vsel %vm470, %v1693, 0
        %v1722 = vsel %vm470, %v1694, 0
        %1724 = vmatprep.subr.mxu0 0.0
        %1725 = vmatpush1.msra.mxu0 0.0
        %1726 = vmatprep.subr.mxu0 0.0
        %1727 = vmatpush1.msra.mxu0 0.0
        %1728 = vmatprep.subr.mxu0 0.0
        %1729 = vmatpush1.msra.mxu0 0.0
        %1730 = vmatprep.subr.mxu0 0.0
        %1731 = vmatpush1.msra.mxu0 0.0
        %1732 = vmatprep.subr.mxu0 0.0
        %1733 = vmatpush1.msra.mxu0 0.0
        %1734 = vmatprep.subr.mxu0 0.0
        %1735 = vmatpush1.msra.mxu0 0.0
        %1736 = vmatprep.subr.mxu0 0.0
        %1737 = vmatpush1.msra.mxu0 0.0
        %1738 = vmatprep.subr.mxu0 0.0
        %1739 = vmatpush1.msra.mxu0 0.0
        %1740 = vmatprep.subr.mxu0 0.0
        %1741 = vmatpush1.msra.mxu0 0.0
        %1742 = vmatprep.subr.mxu0 0.0
        %1743 = vmatpush1.msra.mxu0 0.0
        %1744 = vmatprep.subr.mxu0 0.0
        %1745 = vmatpush1.msra.mxu0 0.0
        %1746 = vmatprep.subr.mxu0 0.0
        %1747 = vmatpush1.msra.mxu0 0.0
        %1748 = vmatprep.subr.mxu0 0.0
        %1749 = vmatpush1.msra.mxu0 %v1699
        %1750 = vmatprep.subr.mxu0 0.0
        %1751 = vmatpush1.msra.mxu0 %v1698
        %1752 = vmatprep.subr.mxu0 0.0
        %1753 = vmatpush1.msra.mxu0 %v1697
        %1754 = vmatprep.subr.mxu0 0.0
        %1755 = vmatpush1.msra.mxu0 %v1696
        %1756 = vmatprep.subr.mxu0 0.0
        %1757 = vmatpush2.msra.mxu0 0.0
        %1758 = vmatprep.subr.mxu0 0.0
        %1759 = vmatpush2.msra.mxu0 0.0
        %1760 = vmatprep.subr.mxu0 0.0
        %1761 = vmatpush2.msra.mxu0 0.0
        %1762 = vmatprep.subr.mxu0 0.0
        %1763 = vmatpush2.msra.mxu0 0.0
        %1764 = vmatprep.subr.mxu0 0.0
        %1765 = vmatpush2.msra.mxu0 0.0
        %1766 = vmatprep.subr.mxu0 0.0
        %1767 = vmatpush2.msra.mxu0 0.0
        %1768 = vmatprep.subr.mxu0 0.0
        %1769 = vmatpush2.msra.mxu0 0.0
        %1770 = vmatprep.subr.mxu0 0.0
        %1771 = vmatpush2.msra.mxu0 0.0
        %1772 = vmatprep.subr.mxu0 0.0
        %1773 = vmatpush2.msra.mxu0 0.0
        %1774 = vmatprep.subr.mxu0 0.0
        %1775 = vmatpush2.msra.mxu0 0.0
        %1776 = vmatprep.subr.mxu0 0.0
        %1777 = vmatpush2.msra.mxu0 0.0
        %1778 = vmatprep.subr.mxu0 0.0
        %1779 = vmatpush2.msra.mxu0 0.0
        %1780 = vmatprep.subr.mxu0 0.0
        %1781 = vmatpush2.msra.mxu0 0.0
        %1782 = vmatprep.subr.mxu0 0.0
        %1783 = vmatpush2.msra.mxu0 0.0
        %1784 = vmatprep.subr.mxu0 0.0
        %1785 = vmatpush2.msra.mxu0 0.0
        %1786 = vmatprep.subr.mxu0 0.0
        %1787 = vmatpush2.msra.mxu0 0.0
        %1788 = vmatprep.mubr.f32.mxu0 0.0
        %1789 = vmatmul.mubr.f32.gmra.mxu0 %v1701
        %v1790 = vpop.f32.mrf.mxu0
        %v1791 = vadd.f32 0.0, %v1790
        %v1792 = vpop.f32.mrf.mxu0
        %1793 = vmatprep.mubr.f32.mxu0 0.0
        %1794 = vmatmul.mubr.f32.gmra.mxu0 %v1704
        %v1795 = vpop.f32.mrf.mxu0
        %v1796 = vadd.f32 0.0, %v1795
        %v1797 = vpop.f32.mrf.mxu0
        %1798 = vmatprep.mubr.f32.mxu0 0.0
        %1799 = vmatmul.mubr.f32.gmra.mxu0 %v1707
        %v1800 = vpop.f32.mrf.mxu0
        %v1801 = vadd.f32 0.0, %v1800
        %v1802 = vpop.f32.mrf.mxu0
        %1803 = vmatprep.mubr.f32.mxu0 0.0
        %1804 = vmatmul.mubr.f32.gmra.mxu0 %v1710
        %v1805 = vpop.f32.mrf.mxu0
        %v1806 = vadd.f32 0.0, %v1805
        %v1807 = vpop.f32.mrf.mxu0
        %1808 = vmatprep.mubr.f32.mxu0 0.0
        %1809 = vmatmul.mubr.f32.gmra.mxu0 %v1713
        %v1810 = vpop.f32.mrf.mxu0
        %v1811 = vadd.f32 0.0, %v1810
        %v1812 = vpop.f32.mrf.mxu0
        %1813 = vmatprep.mubr.f32.mxu0 0.0
        %1814 = vmatmul.mubr.f32.gmra.mxu0 %v1716
        %v1815 = vpop.f32.mrf.mxu0
        %v1816 = vadd.f32 0.0, %v1815
        %v1817 = vpop.f32.mrf.mxu0
        %1818 = vmatprep.mubr.f32.mxu0 0.0
        %1819 = vmatmul.mubr.f32.gmra.mxu0 %v1719
        %v1820 = vpop.f32.mrf.mxu0
        %v1821 = vadd.f32 0.0, %v1820
        %v1822 = vpop.f32.mrf.mxu0
        %1823 = vmatprep.mubr.f32.mxu0 0.0
        %1824 = vmatmul.mubr.f32.gmra.mxu0 %v1722
        %v1825 = vpop.f32.mrf.mxu0
        %v1826 = vadd.f32 0.0, %v1825
        %v1827 = vpop.f32.mrf.mxu0
        %1828 = vdwg.mxu0
        %v1829 = vadd.f32 %v1679, %v1791
        %v1830 = vadd.f32 %v1680, %v1796
        %v1831 = vadd.f32 %v1681, %v1801
        %v1832 = vadd.f32 %v1682, %v1806
        %v1833 = vadd.f32 %v1683, %v1811
        %v1834 = vadd.f32 %v1684, %v1816
        %v1835 = vadd.f32 %v1685, %v1821
        %v1836 = vadd.f32 %v1686, %v1826
        %v1837 = vlaneseq
        %v1838 = vshrl.u32 %v1837, 7
        %v1839 = vsub.s32 0, %v1838
        %v1840 = vrot.slane %v325, %v1839
        %v1841 = vadd.f32 %v1829, %v1840
        %v1842 = vadd.f32 %v1830, %v1840
        %v1843 = vadd.f32 %v1831, %v1840
        %v1844 = vadd.f32 %v1832, %v1840
        %v1845 = vadd.f32 %v1833, %v1840
        %v1846 = vadd.f32 %v1834, %v1840
        %v1847 = vadd.f32 %v1835, %v1840
        %v1848 = vadd.f32 %v1836, %v1840
        %v1849 = vmax.f32 %v1841, 0.0
        %v1850 = vmax.f32 %v1842, 0.0
        %v1851 = vmax.f32 %v1843, 0.0
        %v1852 = vmax.f32 %v1844, 0.0
        %v1853 = vmax.f32 %v1845, 0.0
        %v1854 = vmax.f32 %v1846, 0.0
        %v1855 = vmax.f32 %v1847, 0.0
        %v1856 = vmax.f32 %v1848, 0.0
        %v1857 = vld [vmem:[#allocation6] sm:$0xff]
        %v1858 = vld [vmem:[#allocation6 + $0x8] sm:$0xff]
        %v1859 = vld [vmem:[#allocation6 + $0x10] sm:$0xff]
        %v1860 = vld [vmem:[#allocation6 + $0x18] sm:$0xff]
        %v1861 = vlaneseq
        %v1862 = vshrl.u32 %v1861, 7
        %v1863 = vsub.s32 0, %v1862
        %v1864 = vrot.slane %v326, %v1863
        %v1866 = vsel %vm470, %v1849, 0
        %v1869 = vsel %vm470, %v1850, 0
        %v1872 = vsel %vm470, %v1851, 0
        %v1875 = vsel %vm470, %v1852, 0
        %v1878 = vsel %vm470, %v1853, 0
        %v1881 = vsel %vm470, %v1854, 0
        %v1884 = vsel %vm470, %v1855, 0
        %v1887 = vsel %vm470, %v1856, 0
        %1889 = vmatprep.subr.mxu0 0.0
        %1890 = vmatpush1.msra.mxu0 0.0
        %1891 = vmatprep.subr.mxu0 0.0
        %1892 = vmatpush1.msra.mxu0 0.0
        %1893 = vmatprep.subr.mxu0 0.0
        %1894 = vmatpush1.msra.mxu0 0.0
        %1895 = vmatprep.subr.mxu0 0.0
        %1896 = vmatpush1.msra.mxu0 0.0
        %1897 = vmatprep.subr.mxu0 0.0
        %1898 = vmatpush1.msra.mxu0 0.0
        %1899 = vmatprep.subr.mxu0 0.0
        %1900 = vmatpush1.msra.mxu0 0.0
        %1901 = vmatprep.subr.mxu0 0.0
        %1902 = vmatpush1.msra.mxu0 0.0
        %1903 = vmatprep.subr.mxu0 0.0
        %1904 = vmatpush1.msra.mxu0 0.0
        %1905 = vmatprep.subr.mxu0 0.0
        %1906 = vmatpush1.msra.mxu0 0.0
        %1907 = vmatprep.subr.mxu0 0.0
        %1908 = vmatpush1.msra.mxu0 0.0
        %1909 = vmatprep.subr.mxu0 0.0
        %1910 = vmatpush1.msra.mxu0 0.0
        %1911 = vmatprep.subr.mxu0 0.0
        %1912 = vmatpush1.msra.mxu0 0.0
        %1913 = vmatprep.subr.mxu0 0.0
        %1914 = vmatpush1.msra.mxu0 %v1860
        %1915 = vmatprep.subr.mxu0 0.0
        %1916 = vmatpush1.msra.mxu0 %v1859
        %1917 = vmatprep.subr.mxu0 0.0
        %1918 = vmatpush1.msra.mxu0 %v1858
        %1919 = vmatprep.subr.mxu0 0.0
        %1920 = vmatpush1.msra.mxu0 %v1857
        %1921 = vmatprep.subr.mxu0 0.0
        %1922 = vmatpush2.msra.mxu0 0.0
        %1923 = vmatprep.subr.mxu0 0.0
        %1924 = vmatpush2.msra.mxu0 0.0
        %1925 = vmatprep.subr.mxu0 0.0
        %1926 = vmatpush2.msra.mxu0 0.0
        %1927 = vmatprep.subr.mxu0 0.0
        %1928 = vmatpush2.msra.mxu0 0.0
        %1929 = vmatprep.subr.mxu0 0.0
        %1930 = vmatpush2.msra.mxu0 0.0
        %1931 = vmatprep.subr.mxu0 0.0
        %1932 = vmatpush2.msra.mxu0 0.0
        %1933 = vmatprep.subr.mxu0 0.0
        %1934 = vmatpush2.msra.mxu0 0.0
        %1935 = vmatprep.subr.mxu0 0.0
        %1936 = vmatpush2.msra.mxu0 0.0
        %1937 = vmatprep.subr.mxu0 0.0
        %1938 = vmatpush2.msra.mxu0 0.0
        %1939 = vmatprep.subr.mxu0 0.0
        %1940 = vmatpush2.msra.mxu0 0.0
        %1941 = vmatprep.subr.mxu0 0.0
        %1942 = vmatpush2.msra.mxu0 0.0
        %1943 = vmatprep.subr.mxu0 0.0
        %1944 = vmatpush2.msra.mxu0 0.0
        %1945 = vmatprep.subr.mxu0 0.0
        %1946 = vmatpush2.msra.mxu0 0.0
        %1947 = vmatprep.subr.mxu0 0.0
        %1948 = vmatpush2.msra.mxu0 0.0
        %1949 = vmatprep.subr.mxu0 0.0
        %1950 = vmatpush2.msra.mxu0 0.0
        %1951 = vmatprep.subr.mxu0 0.0
        %1952 = vmatpush2.msra.mxu0 0.0
        %1953 = vmatprep.mubr.f32.mxu0 0.0
        %1954 = vmatmul.mubr.f32.gmra.mxu0 %v1866
        %v1955 = vpop.f32.mrf.mxu0
        %v1956 = vadd.f32 %v1864, %v1955
        %v1957 = vpop.f32.mrf.mxu0
        %1958 = vmatprep.mubr.f32.mxu0 0.0
        %1959 = vmatmul.mubr.f32.gmra.mxu0 %v1869
        %v1960 = vpop.f32.mrf.mxu0
        %v1961 = vadd.f32 %v1864, %v1960
        %v1962 = vpop.f32.mrf.mxu0
        %1963 = vmatprep.mubr.f32.mxu0 0.0
        %1964 = vmatmul.mubr.f32.gmra.mxu0 %v1872
        %v1965 = vpop.f32.mrf.mxu0
        %v1966 = vadd.f32 %v1864, %v1965
        %v1967 = vpop.f32.mrf.mxu0
        %1968 = vmatprep.mubr.f32.mxu0 0.0
        %1969 = vmatmul.mubr.f32.gmra.mxu0 %v1875
        %v1970 = vpop.f32.mrf.mxu0
        %v1971 = vadd.f32 %v1864, %v1970
        %v1972 = vpop.f32.mrf.mxu0
        %1973 = vmatprep.mubr.f32.mxu0 0.0
        %1974 = vmatmul.mubr.f32.gmra.mxu0 %v1878
        %v1975 = vpop.f32.mrf.mxu0
        %v1976 = vadd.f32 %v1864, %v1975
        %v1977 = vpop.f32.mrf.mxu0
        %1978 = vmatprep.mubr.f32.mxu0 0.0
        %1979 = vmatmul.mubr.f32.gmra.mxu0 %v1881
        %v1980 = vpop.f32.mrf.mxu0
        %v1981 = vadd.f32 %v1864, %v1980
        %v1982 = vpop.f32.mrf.mxu0
        %1983 = vmatprep.mubr.f32.mxu0 0.0
        %1984 = vmatmul.mubr.f32.gmra.mxu0 %v1884
        %v1985 = vpop.f32.mrf.mxu0
        %v1986 = vadd.f32 %v1864, %v1985
        %v1987 = vpop.f32.mrf.mxu0
        %1988 = vmatprep.mubr.f32.mxu0 0.0
        %1989 = vmatmul.mubr.f32.gmra.mxu0 %v1887
        %v1990 = vpop.f32.mrf.mxu0
        %v1991 = vadd.f32 %v1864, %v1990
        %v1992 = vpop.f32.mrf.mxu0
        %1993 = vdwg.mxu0
        %v1994 = vadd.f32 %v1956, %v1961
        %v1995 = vadd.f32 %v1994, %v1966
        %v1996 = vadd.f32 %v1995, %v1971
        %v1997 = vadd.f32 %v1996, %v1976
        %v1998 = vadd.f32 %v1997, %v1981
        %v1999 = vadd.f32 %v1998, %v1986
        %v2000 = vadd.f32 %v1999, %v1991
        %v2001 = vrot.slane %v2000, 4
        %v2002 = vadd.f32 %v2000, %v2001
        %v2003 = vrot.slane %v2002, 2
        %v2004 = vadd.f32 %v2002, %v2003
        %v2005 = vrot.slane %v2004, 1
        %v2006 = vadd.f32 %v2004, %v2005
        %v2007 = vrcp.pop 64.0
        %v2008 = vmul.f32 %v2006, %v2007
        %v2009 = vld [vmem:[%s4] sm:$0xff]
        %v2010 = vld [vmem:[%s4 + $0x8] sm:$0xff]
        %v2011 = vld [vmem:[%s4 + $0x10] sm:$0xff]
        %v2012 = vld [vmem:[%s4 + $0x18] sm:$0xff]
        %v2013 = vld [vmem:[%s4 + $0x20] sm:$0xff]
        %v2014 = vld [vmem:[%s4 + $0x28] sm:$0xff]
        %v2015 = vld [vmem:[%s4 + $0x30] sm:$0xff]
        %v2016 = vld [vmem:[%s4 + $0x38] sm:$0xff]
        %v2017 = vld [vmem:[%s4 + $0x40] sm:$0xff]
        %v2018 = vld [vmem:[%s4 + $0x48] sm:$0xff]
        %v2019 = vld [vmem:[%s4 + $0x50] sm:$0xff]
        %v2020 = vld [vmem:[%s4 + $0x58] sm:$0xff]
        %v2021 = vld [vmem:[%s4 + $0x60] sm:$0xff]
        %v2022 = vld [vmem:[%s4 + $0x68] sm:$0xff]
        %v2023 = vld [vmem:[%s4 + $0x70] sm:$0xff]
        %v2024 = vld [vmem:[%s4 + $0x78] sm:$0xff]
        %2025 = vmatprep.subr.mxu0 0.0
        %2026 = vmatpush1.msra.mxu0 %v2024
        %2027 = vmatprep.subr.mxu0 0.0
        %2028 = vmatpush1.msra.mxu0 %v2023
        %2029 = vmatprep.subr.mxu0 0.0
        %2030 = vmatpush1.msra.mxu0 %v2022
        %2031 = vmatprep.subr.mxu0 0.0
        %2032 = vmatpush1.msra.mxu0 %v2021
        %2033 = vmatprep.subr.mxu0 0.0
        %2034 = vmatpush1.msra.mxu0 %v2020
        %2035 = vmatprep.subr.mxu0 0.0
        %2036 = vmatpush1.msra.mxu0 %v2019
        %2037 = vmatprep.subr.mxu0 0.0
        %2038 = vmatpush1.msra.mxu0 %v2018
        %2039 = vmatprep.subr.mxu0 0.0
        %2040 = vmatpush1.msra.mxu0 %v2017
        %2041 = vmatprep.subr.mxu0 0.0
        %2042 = vmatpush1.msra.mxu0 %v2016
        %2043 = vmatprep.subr.mxu0 0.0
        %2044 = vmatpush1.msra.mxu0 %v2015
        %2045 = vmatprep.subr.mxu0 0.0
        %2046 = vmatpush1.msra.mxu0 %v2014
        %2047 = vmatprep.subr.mxu0 0.0
        %2048 = vmatpush1.msra.mxu0 %v2013
        %2049 = vmatprep.subr.mxu0 0.0
        %2050 = vmatpush1.msra.mxu0 %v2012
        %2051 = vmatprep.subr.mxu0 0.0
        %2052 = vmatpush1.msra.mxu0 %v2011
        %2053 = vmatprep.subr.mxu0 0.0
        %2054 = vmatpush1.msra.mxu0 %v2010
        %2055 = vmatprep.subr.mxu0 0.0
        %2056 = vmatpush1.msra.mxu0 %v2009
        %2057 = vmatprep.subr.mxu0 0.0
        %2058 = vmatpush2.msra.mxu0 0.0
        %2059 = vmatprep.subr.mxu0 0.0
        %2060 = vmatpush2.msra.mxu0 0.0
        %2061 = vmatprep.subr.mxu0 0.0
        %2062 = vmatpush2.msra.mxu0 0.0
        %2063 = vmatprep.subr.mxu0 0.0
        %2064 = vmatpush2.msra.mxu0 0.0
        %2065 = vmatprep.subr.mxu0 0.0
        %2066 = vmatpush2.msra.mxu0 0.0
        %2067 = vmatprep.subr.mxu0 0.0
        %2068 = vmatpush2.msra.mxu0 0.0
        %2069 = vmatprep.subr.mxu0 0.0
        %2070 = vmatpush2.msra.mxu0 0.0
        %2071 = vmatprep.subr.mxu0 0.0
        %2072 = vmatpush2.msra.mxu0 0.0
        %2073 = vmatprep.subr.mxu0 0.0
        %2074 = vmatpush2.msra.mxu0 0.0
        %2075 = vmatprep.subr.mxu0 0.0
        %2076 = vmatpush2.msra.mxu0 0.0
        %2077 = vmatprep.subr.mxu0 0.0
        %2078 = vmatpush2.msra.mxu0 0.0
        %2079 = vmatprep.subr.mxu0 0.0
        %2080 = vmatpush2.msra.mxu0 0.0
        %2081 = vmatprep.subr.mxu0 0.0
        %2082 = vmatpush2.msra.mxu0 0.0
        %2083 = vmatprep.subr.mxu0 0.0
        %2084 = vmatpush2.msra.mxu0 0.0
        %2085 = vmatprep.subr.mxu0 0.0
        %2086 = vmatpush2.msra.mxu0 0.0
        %2087 = vmatprep.subr.mxu0 0.0
        %2088 = vmatpush2.msra.mxu0 0.0
        %2089 = vmatprep.mubr.f32.mxu0 0.0
        %2090 = vmatmul.mubr.f32.gmra.mxu0 %v2008
        %v2091 = vpop.f32.mrf.mxu0
        %v2092 = vadd.f32 %v327, %v2091
        %v2093 = vpop.f32.mrf.mxu0
        %2094 = vdwg.mxu0
        %v2095 = vmax.f32 %v2092, 0.0
        %v2096 = vld [vmem:[#allocation8] sm:$0xff]
        %vm2097 = vcmask 64512
        %v2099 = vsel %vm2097, %v2095, 0
        %2101 = vmatprep.subr.mxu0 0.0
        %2102 = vmatpush1.msra.mxu0 0.0
        %2103 = vmatprep.subr.mxu0 0.0
        %2104 = vmatpush1.msra.mxu0 0.0
        %2105 = vmatprep.subr.mxu0 0.0
        %2106 = vmatpush1.msra.mxu0 0.0
        %2107 = vmatprep.subr.mxu0 0.0
        %2108 = vmatpush1.msra.mxu0 0.0
        %2109 = vmatprep.subr.mxu0 0.0
        %2110 = vmatpush1.msra.mxu0 0.0
        %2111 = vmatprep.subr.mxu0 0.0
        %2112 = vmatpush1.msra.mxu0 0.0
        %2113 = vmatprep.subr.mxu0 0.0
        %2114 = vmatpush1.msra.mxu0 0.0
        %2115 = vmatprep.subr.mxu0 0.0
        %2116 = vmatpush1.msra.mxu0 0.0
        %2117 = vmatprep.subr.mxu0 0.0
        %2118 = vmatpush1.msra.mxu0 0.0
        %2119 = vmatprep.subr.mxu0 0.0
        %2120 = vmatpush1.msra.mxu0 0.0
        %2121 = vmatprep.subr.mxu0 0.0
        %2122 = vmatpush1.msra.mxu0 0.0
        %2123 = vmatprep.subr.mxu0 0.0
        %2124 = vmatpush1.msra.mxu0 0.0
        %2125 = vmatprep.subr.mxu0 0.0
        %2126 = vmatpush1.msra.mxu0 0.0
        %2127 = vmatprep.subr.mxu0 0.0
        %2128 = vmatpush1.msra.mxu0 0.0
        %2129 = vmatprep.subr.mxu0 0.0
        %2130 = vmatpush1.msra.mxu0 0.0
        %2131 = vmatprep.subr.mxu0 0.0
        %2132 = vmatpush1.msra.mxu0 %v2096
        %2133 = vmatprep.subr.mxu0 0.0
        %2134 = vmatpush2.msra.mxu0 0.0
        %2135 = vmatprep.subr.mxu0 0.0
        %2136 = vmatpush2.msra.mxu0 0.0
        %2137 = vmatprep.subr.mxu0 0.0
        %2138 = vmatpush2.msra.mxu0 0.0
        %2139 = vmatprep.subr.mxu0 0.0
        %2140 = vmatpush2.msra.mxu0 0.0
        %2141 = vmatprep.subr.mxu0 0.0
        %2142 = vmatpush2.msra.mxu0 0.0
        %2143 = vmatprep.subr.mxu0 0.0
        %2144 = vmatpush2.msra.mxu0 0.0
        %2145 = vmatprep.subr.mxu0 0.0
        %2146 = vmatpush2.msra.mxu0 0.0
        %2147 = vmatprep.subr.mxu0 0.0
        %2148 = vmatpush2.msra.mxu0 0.0
        %2149 = vmatprep.subr.mxu0 0.0
        %2150 = vmatpush2.msra.mxu0 0.0
        %2151 = vmatprep.subr.mxu0 0.0
        %2152 = vmatpush2.msra.mxu0 0.0
        %2153 = vmatprep.subr.mxu0 0.0
        %2154 = vmatpush2.msra.mxu0 0.0
        %2155 = vmatprep.subr.mxu0 0.0
        %2156 = vmatpush2.msra.mxu0 0.0
        %2157 = vmatprep.subr.mxu0 0.0
        %2158 = vmatpush2.msra.mxu0 0.0
        %2159 = vmatprep.subr.mxu0 0.0
        %2160 = vmatpush2.msra.mxu0 0.0
        %2161 = vmatprep.subr.mxu0 0.0
        %2162 = vmatpush2.msra.mxu0 0.0
        %2163 = vmatprep.subr.mxu0 0.0
        %2164 = vmatpush2.msra.mxu0 0.0
        %2165 = vmatprep.mubr.f32.mxu0 0.0
        %2166 = vmatmul.mubr.f32.gmra.mxu0 %v2099
        %v2167 = vpop.f32.mrf.mxu0
        %v2168 = vadd.f32 %v328, %v2167
        %v2169 = vpop.f32.mrf.mxu0
        %2170 = vdwg.mxu0
        %v2171 = vxor.u32 %v2168, 2147483648
        %v2172 = vmul.f32 %v2171, 1.442695
        %v2173 = vpow.pop %v2172
        %v2174 = vadd.f32 %v2173, 1.0
        %v2175 = vrcp.pop %v2174
        %v2176 = vmul.f32 1.0, %v2175
        %v2177 = vlaneseq
        %v2178 = vshrl.u32 %v2177, 7
        %v2179 = vsub.s32 0, %v2178
        %v2180 = vrot.slane %v2176, %v2179
        %v2181 = vmul.f32 %v1956, %v2180
        %v2182 = vmul.f32 %v1961, %v2180
        %v2183 = vmul.f32 %v1966, %v2180
        %v2184 = vmul.f32 %v1971, %v2180
        %v2185 = vmul.f32 %v1976, %v2180
        %v2186 = vmul.f32 %v1981, %v2180
        %v2187 = vmul.f32 %v1986, %v2180
        %v2188 = vmul.f32 %v1991, %v2180
        %v2189 = vld [vmem:[%s285] sm:$0xff]
        %v2190 = vld [vmem:[%s285 + $0x8] sm:$0xff]
        %v2191 = vld [vmem:[%s285 + $0x10] sm:$0xff]
        %v2192 = vld [vmem:[%s285 + $0x18] sm:$0xff]
        %v2193 = vld [vmem:[%s285 + $0x20] sm:$0xff]
        %v2194 = vld [vmem:[%s285 + $0x28] sm:$0xff]
        %v2195 = vld [vmem:[%s285 + $0x30] sm:$0xff]
        %v2196 = vld [vmem:[%s285 + $0x38] sm:$0xff]
        %v2197 = vadd.f32 %v2181, %v2189
        %v2198 = vadd.f32 %v2182, %v2190
        %v2199 = vadd.f32 %v2183, %v2191
        %v2200 = vadd.f32 %v2184, %v2192
        %v2201 = vadd.f32 %v2185, %v2193
        %v2202 = vadd.f32 %v2186, %v2194
        %v2203 = vadd.f32 %v2187, %v2195
        %v2204 = vadd.f32 %v2188, %v2196
        %v2205 = vmax.f32 %v2197, 0.0
        %v2206 = vmax.f32 %v2198, 0.0
        %v2207 = vmax.f32 %v2199, 0.0
        %v2208 = vmax.f32 %v2200, 0.0
        %v2209 = vmax.f32 %v2201, 0.0
        %v2210 = vmax.f32 %v2202, 0.0
        %v2211 = vmax.f32 %v2203, 0.0
        %v2212 = vmax.f32 %v2204, 0.0
        %2213 = vst [vmem:[%s323] sm:$0xff] %v2205
        %2214 = vst [vmem:[%s323 + $0x8] sm:$0xff] %v2206
        %2215 = vst [vmem:[%s323 + $0x10] sm:$0xff] %v2207
        %2216 = vst [vmem:[%s323 + $0x18] sm:$0xff] %v2208
        %2217 = vst [vmem:[%s323 + $0x20] sm:$0xff] %v2209
        %2218 = vst [vmem:[%s323 + $0x28] sm:$0xff] %v2210
        %2219 = vst [vmem:[%s323 + $0x30] sm:$0xff] %v2211
        %2220 = vst [vmem:[%s323 + $0x38] sm:$0xff] %v2212
        %s2221 = sand.u32 %s185, 1
        %s2222 = scalar_lea.sflag [#allocation5], %s2221
        %s2223 = sand.u32 %s185, 1
        %s2224 = smul.addr %s2223, 64
        %s2225 = scalar_lea.vmem [#allocation9], %s2224
        // Predicated region
        $region61: #{tpu_custom_call.1} parent=47 // pred_check
          %p2226 = pneg %p195
        $region62: #{tpu_custom_call.1} parent=47 // pred_check_branch
          %2228 = sbr.rel (%p2226) target = $region64
        $region63: #{tpu_custom_call.1} parent=47 // pred_region
          %s2230 = ssub.s32 1024, 1024
          %2231 = vsyncadd %s2222, %s2230
          %s2232 = smul.addr %s25, 8
          %s2233 = smul.addr %s2232, 128
          %s2234 = scalar_lea.hbm %s7, %s2233
          %s2235 = sshll.u32 %s2225, 4
          %s2236 = int_to_ptr.vmem [resolvable:$true] %s2235
          %2241 = dma.vmem_to_hbm [thread:$0]  %s2236, 1024, %s2234, %s2222, 128, 128, 8
        $region64: #{tpu_custom_call.1} parent=47 // pred_fallthru
          _
      $region48: #{tpu_custom_call.1} parent=5 // pred_fallthru
        _
      %p2242 = scmp.le.s32.totalorder 2, %s20
      // Predicated region
      $region65: #{tpu_custom_call.1} parent=5 // pred_check
        %p2243 = pneg %p2242
      $region66: #{tpu_custom_call.1} parent=5 // pred_check_branch
        %2245 = sbr.rel (%p2243) target = $region68
      $region67: #{tpu_custom_call.1} parent=5 // pred_region
        %s2246 = ssub.s32 %s20, 2
        // Predicated region
        $region69: #{tpu_custom_call.1} parent=67 // pred_check
          %p2247 = pneg %p201
        $region70: #{tpu_custom_call.1} parent=67 // pred_check_branch
          %2249 = sbr.rel (%p2247) target = $region72
        $region71: #{tpu_custom_call.1} parent=67 // pred_region
          %s2250 = sand.u32 %s186, 1
          %s2251 = scalar_lea.sflag [#allocation5], %s2250
          %s2252 = sand.u32 %s186, 1
          %s2253 = smul.addr %s2252, 64
          %s2254 = scalar_lea.vmem [#allocation9], %s2253
          %2255 = dma.done %s2251, 1024
        $region72: #{tpu_custom_call.1} parent=67 // pred_fallthru
          _
      $region68: #{tpu_custom_call.1} parent=5 // pred_fallthru
        _
    $region6: #{tpu_custom_call.1} parent=1 // loop_footer
      %s24 = sadd.s32 1, %s20
    $region7: #{tpu_custom_call.1} parent=1 // loop_footer_branch
      %19 = sbr.rel target = $region3
    $region8: #{tpu_custom_call.1} parent=1 // loop_exit
      _
    %2256 = vsyncpa [#allocation4], 1
    %s2257 = scalar_lea.sflag [#allocation4], 1
    %2258 = vsyncpa %s2257, 1
    %2259 = vsyncpa [#allocation7], 1
    %2260 = vsyncpa [#allocation5], 1
    %s2261 = scalar_lea.sflag [#allocation5], 1
    %2262 = vsyncpa %s2261, 1

</llo_original>
